<compile_context>
chip_gen: v7x
topology: tpu7x:2x2x1
jax: 0.10.0
libtpu: 0.0.40
codegen_flags: <defaults>
</compile_context>

<pallas_src>
import jax
import jax.numpy as jnp
from jax.experimental import pallas as pl
from jax.experimental.pallas import tpu as pltpu


def _round_up(x, m):
    return (x + m - 1) // m * m


# ---------------------------------------------------------------------------
# Kernel A: fused conv + bias + ReLU + 2x2 max-pool (used for conv1 and conv2).
#
#   p_ref : (B, K, P)  bf16  6x6/stride-2 patches; pooled pixels P on lanes
#   w_ref : (4, C, K)  bf16  zero-embedded 5x5 weights, one per pooling corner
#   b_ref : (C, 1)     f32
#   o_ref : (B, C, P)  bf16  pooled activation
# ---------------------------------------------------------------------------
def _conv_relu_pool_kernel(p_ref, w_ref, b_ref, o_ref):
    p = p_ref[...]                                      # (B, K, P) bf16
    bsz = p.shape[0]
    n_out, k = w_ref.shape[1], w_ref.shape[2]

    def corner(j):
        # (B, C, K) @ (B, K, P) batched matmul -> (B, C, P), f32 MXU accumulation.
        w_b = jnp.broadcast_to(w_ref[j][None], (bsz, n_out, k))
        return jax.lax.dot_general(
            w_b, p,
            dimension_numbers=(((2,), (1,)), ((0,), (0,))),
            preferred_element_type=jnp.float32)

    # One MXU pass per pooling-window corner; elementwise max == the 2x2 pool.
    y = jnp.maximum(jnp.maximum(corner(0), corner(1)),
                    jnp.maximum(corner(2), corner(3)))
    # Bias-add / ReLU commute with the max; keep the epilogue in f32 (v5e-friendly).
    y = jnp.maximum(y + b_ref[...], 0.0)
    o_ref[...] = y.astype(o_ref.dtype)


def conv_relu_pool(patches, w4, bias, *, batch_tile):
    n, k, p = patches.shape
    c_out = w4.shape[1]
    assert n % batch_tile == 0
    return pl.pallas_call(
        _conv_relu_pool_kernel,
        out_shape=jax.ShapeDtypeStruct((n, c_out, p), jnp.bfloat16),
        grid=(n // batch_tile,),
        in_specs=[
            pl.BlockSpec((batch_tile, k, p), lambda i: (i, 0, 0)),
            pl.BlockSpec((4, c_out, k), lambda i: (0, 0, 0)),
            pl.BlockSpec((c_out, 1), lambda i: (0, 0)),
        ],
        out_specs=pl.BlockSpec((batch_tile, c_out, p), lambda i: (i, 0, 0)),
        compiler_params=pltpu.CompilerParams(dimension_semantics=("parallel",)),
    )(patches, w4, bias)


# ---------------------------------------------------------------------------
# Kernel B: fused fc1+ReLU -> fc2+ReLU -> fc3 -> log_softmax.
#   Weights bf16 (VMEM-resident across the whole grid), biases/activations f32.
# ---------------------------------------------------------------------------
def _fc_stack_kernel(x_ref, w1_ref, b1_ref, w2_ref, b2_ref, w3_ref, b3_ref, o_ref):
    h1 = jnp.dot(x_ref[...], w1_ref[...], preferred_element_type=jnp.float32) + b1_ref[...]
    h1 = jnp.maximum(h1, 0.0).astype(w2_ref.dtype)
    h2 = jnp.dot(h1, w2_ref[...], preferred_element_type=jnp.float32) + b2_ref[...]
    h2 = jnp.maximum(h2, 0.0).astype(w3_ref.dtype)
    z = jnp.dot(h2, w3_ref[...], preferred_element_type=jnp.float32) + b3_ref[...]
    z = z - jnp.max(z, axis=-1, keepdims=True)
    lse = jnp.log(jnp.sum(jnp.exp(z), axis=-1, keepdims=True))
    o_ref[...] = (z - lse).astype(o_ref.dtype)


def fc_stack(x, w1, b1, w2, b2, w3, b3, *, row_tile):
    n, d = x.shape
    n_cls = w3.shape[1]
    assert n % row_tile == 0

    def full(a):
        nd = a.ndim
        return pl.BlockSpec(a.shape, lambda i, _nd=nd: (0,) * _nd)

    return pl.pallas_call(
        _fc_stack_kernel,
        out_shape=jax.ShapeDtypeStruct((n, n_cls), jnp.float32),
        grid=(n // row_tile,),
        in_specs=[
            pl.BlockSpec((row_tile, d), lambda i: (i, 0)),
            full(w1), full(b1), full(w2), full(b2), full(w3), full(b3),
        ],
        out_specs=pl.BlockSpec((row_tile, n_cls), lambda i: (i, 0)),
        compiler_params=pltpu.CompilerParams(dimension_semantics=("parallel",)),
    )(x, w1, b1, w2, b2, w3, b3)


# ---------------------------------------------------------------------------
# Wrapper glue.
# ---------------------------------------------------------------------------
def _pool_corner_patches(x, pad):
    """6x6 windows at stride 2: one patch per 2x2 pooling cell.

    Each 6x6 patch contains the four 5x5 conv windows of its pooling cell, so a
    single XLA gather provides everything the fused conv+pool kernel needs — no
    corner-regroup reshape/transpose and ~2.8x fewer patch bytes than per-corner
    im2col. Feature order is (c, dy, dx), matching the embedded weights below.
    """
    n, c, h, _ = x.shape
    ph = (h + 2 * pad - 6) // 2 + 1
    p = jax.lax.conv_general_dilated_patches(
        x, filter_shape=(6, 6), window_strides=(2, 2),
        padding=((pad, pad), (pad, pad)),
        dimension_numbers=("NCHW", "OIHW", "NCHW"),
    )                                              # (N, C*36, PH, PW)
    return p.reshape(n, c * 36, ph * ph)           # free trailing-dim merge


def _embed_corner_weights(w):
    """(C_out, C_in, 5, 5) -> (4, C_out, C_in*36): the 5x5 kernel placed at each
    of the four (dy, dx) in {0,1}^2 offsets of a 6x6 window (zero elsewhere)."""
    co, ci = w.shape[0], w.shape[1]
    mats = []
    for a in (0, 1):
        for b in (0, 1):
            we = jnp.zeros((co, ci, 6, 6), w.dtype).at[:, :, a:a + 5, b:b + 5].set(w)
            mats.append(we.reshape(co, ci * 36))
    return jnp.stack(mats)


def prepare_params(params):
    """One-time weight prep (hoisted out of the per-forward path): corner
    embedding, FC transpose, bf16 casts, bias reshapes."""
    bf16 = jnp.bfloat16
    f32 = jnp.float32
    return {
        "c1w": _embed_corner_weights(params["conv1_w"]).astype(bf16),   # (4, 6, 36)
        "c1b": params["conv1_b"].reshape(6, 1).astype(f32),
        "c2w": _embed_corner_weights(params["conv2_w"]).astype(bf16),   # (4, 16, 216)
        "c2b": params["conv2_b"].reshape(16, 1).astype(f32),
        "w1": params["fc1_w"].T.astype(bf16), "b1": params["fc1_b"].reshape(1, 120).astype(f32),
        "w2": params["fc2_w"].T.astype(bf16), "b2": params["fc2_b"].reshape(1, 84).astype(f32),
        "w3": params["fc3_w"].T.astype(bf16), "b3": params["fc3_b"].reshape(1, 10).astype(f32),
    }


def init_params(key):
    ks = jax.random.split(key, 10)

    def nrm(k, shape, scale):
        return (scale * jax.random.normal(k, shape)).astype(jnp.float32)

    return {
        "conv1_w": nrm(ks[0], (6, 1, 5, 5), 0.2),
        "conv1_b": nrm(ks[1], (6,), 0.1),
        "conv2_w": nrm(ks[2], (16, 6, 5, 5), 0.08),
        "conv2_b": nrm(ks[3], (16,), 0.1),
        "fc1_w": nrm(ks[4], (120, 400), 0.05),
        "fc1_b": nrm(ks[5], (120,), 0.05),
        "fc2_w": nrm(ks[6], (84, 120), 0.09),
        "fc2_b": nrm(ks[7], (84,), 0.05),
        "fc3_w": nrm(ks[8], (10, 84), 0.1),
        "fc3_b": nrm(ks[9], (10,), 0.05),
    }


@jax.jit
def lenet5_forward(prep, x):
    n = x.shape[0]
    if n <= 128:
        npad, tile = n, n                      # single fat grid step
    else:
        npad, tile = _round_up(n, 128), 128    # >= 2 even-ish steps (v7x 2 TCs)

    xb = x.astype(jnp.bfloat16)
    if npad != n:
        xb = jnp.pad(xb, ((0, npad - n), (0, 0), (0, 0), (0, 0)))

    # conv1 (1->6, 5x5, pad=2) + ReLU + 2x2 pool : -> (npad, 6, 196) bf16
    p1 = _pool_corner_patches(xb, pad=2)
    y1 = conv_relu_pool(p1, prep["c1w"], prep["c1b"], batch_tile=tile)

    # conv2 (6->16, 5x5, pad=0) + ReLU + 2x2 pool : -> (npad, 16, 25) bf16
    p2 = _pool_corner_patches(y1.reshape(npad, 6, 14, 14), pad=0)
    y2 = conv_relu_pool(p2, prep["c2w"], prep["c2b"], batch_tile=tile)

    # flatten: trailing-dim merge == torch's NCHW .view(-1, 16*5*5); free in XLA.
    flat = y2.reshape(npad, 16 * 5 * 5)

    out = fc_stack(flat, prep["w1"], prep["b1"], prep["w2"], prep["b2"],
                   prep["w3"], prep["b3"], row_tile=tile)
    return out[:n]


# ---------------------------------------------------------------------------
# Pure-XLA reference (mirrors the kernels' bf16-operand / f32-accumulate math)
# ---------------------------------------------------------------------------
def _conv_pool_ref(inp, w, b, pad):
    bf16 = jnp.bfloat16
    dn = ("NCHW", "OIHW", "NCHW")
    y = jax.lax.conv_general_dilated(
        inp.astype(bf16), w.astype(bf16), (1, 1), ((pad, pad), (pad, pad)),
        dimension_numbers=dn, preferred_element_type=jnp.float32)
    y = jnp.maximum(y + b[None, :, None, None], 0.0)
    return jax.lax.reduce_window(y, -jnp.inf, jax.lax.max,
                                 (1, 1, 2, 2), (1, 1, 2, 2), "VALID")


@jax.jit
def lenet5_reference(params, x):
    bf16 = jnp.bfloat16
    y = _conv_pool_ref(x, params["conv1_w"], params["conv1_b"], 2)
    y = _conv_pool_ref(y, params["conv2_w"], params["conv2_b"], 0)
    h = y.reshape(x.shape[0], 400)
    h = jnp.maximum(jnp.dot(h.astype(bf16), params["fc1_w"].T.astype(bf16),
                            preferred_element_type=jnp.float32) + params["fc1_b"], 0.0)
    h = jnp.maximum(jnp.dot(h.astype(bf16), params["fc2_w"].T.astype(bf16),
                            preferred_element_type=jnp.float32) + params["fc2_b"], 0.0)
    z = jnp.dot(h.astype(bf16), params["fc3_w"].T.astype(bf16),
                preferred_element_type=jnp.float32) + params["fc3_b"]
    return jax.nn.log_softmax(z, axis=-1)


if __name__ == "__main__":
    key = jax.random.PRNGKey(0)
    pkey, xkey = jax.random.split(key)
    params = init_params(pkey)
    prep = prepare_params(params)

    # LeNet5 requires 28x28 single-channel inputs (the 16*5*5 flatten is hard-coded).
    N = 4
    x = jax.random.normal(xkey, (N, 1, 28, 28), dtype=jnp.float32)

    out = jax.block_until_ready(lenet5_forward(prep, x))
    assert out.shape == (N, 10)

    # log_softmax rows must exponentiate-sum to ~1
    assert bool(jnp.all(jnp.abs(jnp.sum(jnp.exp(out), axis=1) - 1.0) < 1e-4))

    # ---- per-layer checks (conv stages vs lax.conv, same bf16/f32 numerics) ----
    xb = x.astype(jnp.bfloat16)
    y1_k = conv_relu_pool(_pool_corner_patches(xb, pad=2),
                          prep["c1w"], prep["c1b"], batch_tile=N)
    y1_ref = _conv_pool_ref(x, params["conv1_w"], params["conv1_b"], 2)
    err1 = float(jnp.max(jnp.abs(y1_k.reshape(N, 6, 14, 14).astype(jnp.float32) - y1_ref)))
    assert err1 < 3e-2, f"conv1 stage mismatch: {err1}"

    y1_img = y1_k.reshape(N, 6, 14, 14)
    y2_k = conv_relu_pool(_pool_corner_patches(y1_img, pad=0),
                          prep["c2w"], prep["c2b"], batch_tile=N)
    y2_ref = _conv_pool_ref(y1_img, params["conv2_w"], params["conv2_b"], 0)
    err2 = float(jnp.max(jnp.abs(y2_k.reshape(N, 16, 5, 5).astype(jnp.float32) - y2_ref)))
    assert err2 < 5e-2, f"conv2 stage mismatch: {err2}"

    # ---- end-to-end check vs a pure-XLA reference with matching numerics ----
    ref = jax.block_until_ready(lenet5_reference(params, x))
    max_err = float(jnp.max(jnp.abs(out - ref)))
    assert max_err < 5e-2, f"mismatch vs reference: {max_err}"

    print("KERNEL_OK")
</pallas_src>

<mosaic_0001>
module attributes {stable_mosaic.version = 11 : i64} {
  func.func @_conv_relu_pool_kernel(%arg0: i32, %arg1: memref<4x36x196xbf16, #tpu.memory_space<vmem>>, %arg2: memref<4x6x36xbf16, #tpu.memory_space<vmem>>, %arg3: memref<6x1xf32, #tpu.memory_space<vmem>>, %arg4: memref<4x6x196xbf16, #tpu.memory_space<vmem>>) attributes {dimension_semantics = [#tpu.dimension_semantics<parallel>], iteration_bounds = array<i64: 1>, scalar_prefetch = 0 : i64, scratch_operands = 0 : i64, tpu.core_type = #tpu.core_type<tc>, window_params = [{transform_indices = @transform_0, window_bounds = array<i64: 4, 36, 196>}, {pipeline_mode = #tpu.pipeline_mode<synchronous>, transform_indices = @transform_1, window_bounds = array<i64: 4, 6, 36>}, {pipeline_mode = #tpu.pipeline_mode<synchronous>, transform_indices = @transform_2, window_bounds = array<i64: 6, 1>}, {transform_indices = @transform_3, window_bounds = array<i64: 4, 6, 196>}]} {
    %c0 = arith.constant 0 : index
    %c0_0 = arith.constant 0 : index
    %c0_1 = arith.constant 0 : index
    %0 = vector.load %arg1[%c0, %c0_0, %c0_1] : memref<4x36x196xbf16, #tpu.memory_space<vmem>>, vector<4x36x196xbf16>
    %c0_2 = arith.constant 0 : index
    %c0_3 = arith.constant 0 : index
    %c0_4 = arith.constant 0 : index
    %1 = vector.load %arg2[%c0_2, %c0_3, %c0_4] : memref<4x6x36xbf16, #tpu.memory_space<vmem>>, vector<1x6x36xbf16>
    %2 = vector.shape_cast %1 : vector<1x6x36xbf16> to vector<6x36xbf16>
    %3 = vector.shape_cast %2 : vector<6x36xbf16> to vector<1x6x36xbf16>
    %4 = vector.shape_cast %3 : vector<1x6x36xbf16> to vector<1x6x36xbf16>
    %5 = vector.broadcast %4 : vector<1x6x36xbf16> to vector<4x6x36xbf16>
    %cst = arith.constant dense<0.000000e+00> : vector<4x6x196xf32>
    %6 = tpu.matmul %5, %0, %cst {dimension_numbers = #tpu.dot_dimension_numbers<[2], [1], [1], [2], [0, 0, 0, 1, 1, 2], [0], [0]>} : vector<4x6x36xbf16>, vector<4x36x196xbf16>, vector<4x6x196xf32> -> vector<4x6x196xf32>
    %c1 = arith.constant 1 : index
    %c0_5 = arith.constant 0 : index
    %c0_6 = arith.constant 0 : index
    %7 = vector.load %arg2[%c1, %c0_5, %c0_6] : memref<4x6x36xbf16, #tpu.memory_space<vmem>>, vector<1x6x36xbf16>
    %8 = vector.shape_cast %7 : vector<1x6x36xbf16> to vector<6x36xbf16>
    %9 = vector.shape_cast %8 : vector<6x36xbf16> to vector<1x6x36xbf16>
    %10 = vector.shape_cast %9 : vector<1x6x36xbf16> to vector<1x6x36xbf16>
    %11 = vector.broadcast %10 : vector<1x6x36xbf16> to vector<4x6x36xbf16>
    %cst_7 = arith.constant dense<0.000000e+00> : vector<4x6x196xf32>
    %12 = tpu.matmul %11, %0, %cst_7 {dimension_numbers = #tpu.dot_dimension_numbers<[2], [1], [1], [2], [0, 0, 0, 1, 1, 2], [0], [0]>} : vector<4x6x36xbf16>, vector<4x36x196xbf16>, vector<4x6x196xf32> -> vector<4x6x196xf32>
    %13 = arith.maximumf %6, %12 : vector<4x6x196xf32>
    %c2 = arith.constant 2 : index
    %c0_8 = arith.constant 0 : index
    %c0_9 = arith.constant 0 : index
    %14 = vector.load %arg2[%c2, %c0_8, %c0_9] : memref<4x6x36xbf16, #tpu.memory_space<vmem>>, vector<1x6x36xbf16>
    %15 = vector.shape_cast %14 : vector<1x6x36xbf16> to vector<6x36xbf16>
    %16 = vector.shape_cast %15 : vector<6x36xbf16> to vector<1x6x36xbf16>
    %17 = vector.shape_cast %16 : vector<1x6x36xbf16> to vector<1x6x36xbf16>
    %18 = vector.broadcast %17 : vector<1x6x36xbf16> to vector<4x6x36xbf16>
    %cst_10 = arith.constant dense<0.000000e+00> : vector<4x6x196xf32>
    %19 = tpu.matmul %18, %0, %cst_10 {dimension_numbers = #tpu.dot_dimension_numbers<[2], [1], [1], [2], [0, 0, 0, 1, 1, 2], [0], [0]>} : vector<4x6x36xbf16>, vector<4x36x196xbf16>, vector<4x6x196xf32> -> vector<4x6x196xf32>
    %c3 = arith.constant 3 : index
    %c0_11 = arith.constant 0 : index
    %c0_12 = arith.constant 0 : index
    %20 = vector.load %arg2[%c3, %c0_11, %c0_12] : memref<4x6x36xbf16, #tpu.memory_space<vmem>>, vector<1x6x36xbf16>
    %21 = vector.shape_cast %20 : vector<1x6x36xbf16> to vector<6x36xbf16>
    %22 = vector.shape_cast %21 : vector<6x36xbf16> to vector<1x6x36xbf16>
    %23 = vector.shape_cast %22 : vector<1x6x36xbf16> to vector<1x6x36xbf16>
    %24 = vector.broadcast %23 : vector<1x6x36xbf16> to vector<4x6x36xbf16>
    %cst_13 = arith.constant dense<0.000000e+00> : vector<4x6x196xf32>
    %25 = tpu.matmul %24, %0, %cst_13 {dimension_numbers = #tpu.dot_dimension_numbers<[2], [1], [1], [2], [0, 0, 0, 1, 1, 2], [0], [0]>} : vector<4x6x36xbf16>, vector<4x36x196xbf16>, vector<4x6x196xf32> -> vector<4x6x196xf32>
    %26 = arith.maximumf %19, %25 : vector<4x6x196xf32>
    %27 = arith.maximumf %13, %26 : vector<4x6x196xf32>
    %c0_14 = arith.constant 0 : index
    %c0_15 = arith.constant 0 : index
    %28 = vector.load %arg3[%c0_14, %c0_15] : memref<6x1xf32, #tpu.memory_space<vmem>>, vector<6x1xf32>
    %29 = vector.shape_cast %28 : vector<6x1xf32> to vector<1x6x1xf32>
    %30 = vector.broadcast %29 : vector<1x6x1xf32> to vector<4x6x196xf32>
    %31 = arith.addf %27, %30 : vector<4x6x196xf32>
    %cst_16 = arith.constant 0.000000e+00 : f32
    %32 = vector.broadcast %cst_16 : f32 to vector<4x6x196xf32>
    %33 = arith.maximumf %31, %32 : vector<4x6x196xf32>
    %34 = arith.truncf %33 : vector<4x6x196xf32> to vector<4x6x196xbf16>
    %c0_17 = arith.constant 0 : index
    %c0_18 = arith.constant 0 : index
    %c0_19 = arith.constant 0 : index
    %35 = vector.load %arg4[%c0_17, %c0_18, %c0_19] : memref<4x6x196xbf16, #tpu.memory_space<vmem>>, vector<4x6x196xbf16>
    tpu.vector_store %arg4[%c0_17, %c0_18, %c0_19], %34 {strides = array<i32>} : memref<4x6x196xbf16, #tpu.memory_space<vmem>>, vector<4x6x196xbf16>,
    return
  }
  func.func @transform_0(%arg0: i32) -> (i32, i32, i32) {
    %c0_i32 = arith.constant 0 : i32
    %c0_i32_0 = arith.constant 0 : i32
    %c0_i32_1 = arith.constant 0 : i32
    return %arg0, %c0_i32, %c0_i32_0 : i32, i32, i32
  }
  func.func @transform_1(%arg0: i32) -> (i32, i32, i32) {
    %c0_i32 = arith.constant 0 : i32
    %c0_i32_0 = arith.constant 0 : i32
    %c0_i32_1 = arith.constant 0 : i32
    %c0_i32_2 = arith.constant 0 : i32
    return %c0_i32, %c0_i32_0, %c0_i32_1 : i32, i32, i32
  }
  func.func @transform_2(%arg0: i32) -> (i32, i32) {
    %c0_i32 = arith.constant 0 : i32
    %c0_i32_0 = arith.constant 0 : i32
    %c0_i32_1 = arith.constant 0 : i32
    return %c0_i32, %c0_i32_0 : i32, i32
  }
  func.func @transform_3(%arg0: i32) -> (i32, i32, i32) {
    %c0_i32 = arith.constant 0 : i32
    %c0_i32_0 = arith.constant 0 : i32
    %c0_i32_1 = arith.constant 0 : i32
    return %arg0, %c0_i32, %c0_i32_0 : i32, i32, i32
  }
}

module attributes {stable_mosaic.version = 11 : i64} {
  func.func @_conv_relu_pool_kernel(%arg0: i32, %arg1: memref<4x216x25xbf16, #tpu.memory_space<vmem>>, %arg2: memref<4x16x216xbf16, #tpu.memory_space<vmem>>, %arg3: memref<16x1xf32, #tpu.memory_space<vmem>>, %arg4: memref<4x16x25xbf16, #tpu.memory_space<vmem>>) attributes {dimension_semantics = [#tpu.dimension_semantics<parallel>], iteration_bounds = array<i64: 1>, scalar_prefetch = 0 : i64, scratch_operands = 0 : i64, tpu.core_type = #tpu.core_type<tc>, window_params = [{transform_indices = @transform_0, window_bounds = array<i64: 4, 216, 25>}, {pipeline_mode = #tpu.pipeline_mode<synchronous>, transform_indices = @transform_1, window_bounds = array<i64: 4, 16, 216>}, {pipeline_mode = #tpu.pipeline_mode<synchronous>, transform_indices = @transform_2, window_bounds = array<i64: 16, 1>}, {transform_indices = @transform_3, window_bounds = array<i64: 4, 16, 25>}]} {
    %c0 = arith.constant 0 : index
    %c0_0 = arith.constant 0 : index
    %c0_1 = arith.constant 0 : index
    %0 = vector.load %arg1[%c0, %c0_0, %c0_1] : memref<4x216x25xbf16, #tpu.memory_space<vmem>>, vector<4x216x25xbf16>
    %c0_2 = arith.constant 0 : index
    %c0_3 = arith.constant 0 : index
    %c0_4 = arith.constant 0 : index
    %1 = vector.load %arg2[%c0_2, %c0_3, %c0_4] : memref<4x16x216xbf16, #tpu.memory_space<vmem>>, vector<1x16x216xbf16>
    %2 = vector.shape_cast %1 : vector<1x16x216xbf16> to vector<16x216xbf16>
    %3 = vector.shape_cast %2 : vector<16x216xbf16> to vector<1x16x216xbf16>
    %4 = vector.shape_cast %3 : vector<1x16x216xbf16> to vector<1x16x216xbf16>
    %5 = vector.broadcast %4 : vector<1x16x216xbf16> to vector<4x16x216xbf16>
    %cst = arith.constant dense<0.000000e+00> : vector<4x16x25xf32>
    %6 = tpu.matmul %5, %0, %cst {dimension_numbers = #tpu.dot_dimension_numbers<[2], [1], [1], [2], [0, 0, 0, 1, 1, 2], [0], [0]>} : vector<4x16x216xbf16>, vector<4x216x25xbf16>, vector<4x16x25xf32> -> vector<4x16x25xf32>
    %c1 = arith.constant 1 : index
    %c0_5 = arith.constant 0 : index
    %c0_6 = arith.constant 0 : index
    %7 = vector.load %arg2[%c1, %c0_5, %c0_6] : memref<4x16x216xbf16, #tpu.memory_space<vmem>>, vector<1x16x216xbf16>
    %8 = vector.shape_cast %7 : vector<1x16x216xbf16> to vector<16x216xbf16>
    %9 = vector.shape_cast %8 : vector<16x216xbf16> to vector<1x16x216xbf16>
    %10 = vector.shape_cast %9 : vector<1x16x216xbf16> to vector<1x16x216xbf16>
    %11 = vector.broadcast %10 : vector<1x16x216xbf16> to vector<4x16x216xbf16>
    %cst_7 = arith.constant dense<0.000000e+00> : vector<4x16x25xf32>
    %12 = tpu.matmul %11, %0, %cst_7 {dimension_numbers = #tpu.dot_dimension_numbers<[2], [1], [1], [2], [0, 0, 0, 1, 1, 2], [0], [0]>} : vector<4x16x216xbf16>, vector<4x216x25xbf16>, vector<4x16x25xf32> -> vector<4x16x25xf32>
    %13 = arith.maximumf %6, %12 : vector<4x16x25xf32>
    %c2 = arith.constant 2 : index
    %c0_8 = arith.constant 0 : index
    %c0_9 = arith.constant 0 : index
    %14 = vector.load %arg2[%c2, %c0_8, %c0_9] : memref<4x16x216xbf16, #tpu.memory_space<vmem>>, vector<1x16x216xbf16>
    %15 = vector.shape_cast %14 : vector<1x16x216xbf16> to vector<16x216xbf16>
    %16 = vector.shape_cast %15 : vector<16x216xbf16> to vector<1x16x216xbf16>
    %17 = vector.shape_cast %16 : vector<1x16x216xbf16> to vector<1x16x216xbf16>
    %18 = vector.broadcast %17 : vector<1x16x216xbf16> to vector<4x16x216xbf16>
    %cst_10 = arith.constant dense<0.000000e+00> : vector<4x16x25xf32>
    %19 = tpu.matmul %18, %0, %cst_10 {dimension_numbers = #tpu.dot_dimension_numbers<[2], [1], [1], [2], [0, 0, 0, 1, 1, 2], [0], [0]>} : vector<4x16x216xbf16>, vector<4x216x25xbf16>, vector<4x16x25xf32> -> vector<4x16x25xf32>
    %c3 = arith.constant 3 : index
    %c0_11 = arith.constant 0 : index
    %c0_12 = arith.constant 0 : index
    %20 = vector.load %arg2[%c3, %c0_11, %c0_12] : memref<4x16x216xbf16, #tpu.memory_space<vmem>>, vector<1x16x216xbf16>
    %21 = vector.shape_cast %20 : vector<1x16x216xbf16> to vector<16x216xbf16>
    %22 = vector.shape_cast %21 : vector<16x216xbf16> to vector<1x16x216xbf16>
    %23 = vector.shape_cast %22 : vector<1x16x216xbf16> to vector<1x16x216xbf16>
    %24 = vector.broadcast %23 : vector<1x16x216xbf16> to vector<4x16x216xbf16>
    %cst_13 = arith.constant dense<0.000000e+00> : vector<4x16x25xf32>
    %25 = tpu.matmul %24, %0, %cst_13 {dimension_numbers = #tpu.dot_dimension_numbers<[2], [1], [1], [2], [0, 0, 0, 1, 1, 2], [0], [0]>} : vector<4x16x216xbf16>, vector<4x216x25xbf16>, vector<4x16x25xf32> -> vector<4x16x25xf32>
    %26 = arith.maximumf %19, %25 : vector<4x16x25xf32>
    %27 = arith.maximumf %13, %26 : vector<4x16x25xf32>
    %c0_14 = arith.constant 0 : index
    %c0_15 = arith.constant 0 : index
    %28 = vector.load %arg3[%c0_14, %c0_15] : memref<16x1xf32, #tpu.memory_space<vmem>>, vector<16x1xf32>
    %29 = vector.shape_cast %28 : vector<16x1xf32> to vector<1x16x1xf32>
    %30 = vector.broadcast %29 : vector<1x16x1xf32> to vector<4x16x25xf32>
    %31 = arith.addf %27, %30 : vector<4x16x25xf32>
    %cst_16 = arith.constant 0.000000e+00 : f32
    %32 = vector.broadcast %cst_16 : f32 to vector<4x16x25xf32>
    %33 = arith.maximumf %31, %32 : vector<4x16x25xf32>
    %34 = arith.truncf %33 : vector<4x16x25xf32> to vector<4x16x25xbf16>
    %c0_17 = arith.constant 0 : index
    %c0_18 = arith.constant 0 : index
    %c0_19 = arith.constant 0 : index
    %35 = vector.load %arg4[%c0_17, %c0_18, %c0_19] : memref<4x16x25xbf16, #tpu.memory_space<vmem>>, vector<4x16x25xbf16>
    tpu.vector_store %arg4[%c0_17, %c0_18, %c0_19], %34 {strides = array<i32>} : memref<4x16x25xbf16, #tpu.memory_space<vmem>>, vector<4x16x25xbf16>,
    return
  }
  func.func @transform_0(%arg0: i32) -> (i32, i32, i32) {
    %c0_i32 = arith.constant 0 : i32
    %c0_i32_0 = arith.constant 0 : i32
    %c0_i32_1 = arith.constant 0 : i32
    return %arg0, %c0_i32, %c0_i32_0 : i32, i32, i32
  }
  func.func @transform_1(%arg0: i32) -> (i32, i32, i32) {
    %c0_i32 = arith.constant 0 : i32
    %c0_i32_0 = arith.constant 0 : i32
    %c0_i32_1 = arith.constant 0 : i32
    %c0_i32_2 = arith.constant 0 : i32
    return %c0_i32, %c0_i32_0, %c0_i32_1 : i32, i32, i32
  }
  func.func @transform_2(%arg0: i32) -> (i32, i32) {
    %c0_i32 = arith.constant 0 : i32
    %c0_i32_0 = arith.constant 0 : i32
    %c0_i32_1 = arith.constant 0 : i32
    return %c0_i32, %c0_i32_0 : i32, i32
  }
  func.func @transform_3(%arg0: i32) -> (i32, i32, i32) {
    %c0_i32 = arith.constant 0 : i32
    %c0_i32_0 = arith.constant 0 : i32
    %c0_i32_1 = arith.constant 0 : i32
    return %arg0, %c0_i32, %c0_i32_0 : i32, i32, i32
  }
}

module attributes {stable_mosaic.version = 11 : i64} {
  func.func @_fc_stack_kernel(%arg0: i32, %arg1: memref<4x400xbf16, #tpu.memory_space<vmem>>, %arg2: memref<400x120xbf16, #tpu.memory_space<vmem>>, %arg3: memref<1x120xf32, #tpu.memory_space<vmem>>, %arg4: memref<120x84xbf16, #tpu.memory_space<vmem>>, %arg5: memref<1x84xf32, #tpu.memory_space<vmem>>, %arg6: memref<84x10xbf16, #tpu.memory_space<vmem>>, %arg7: memref<1x10xf32, #tpu.memory_space<vmem>>, %arg8: memref<4x10xf32, #tpu.memory_space<vmem>>) attributes {dimension_semantics = [#tpu.dimension_semantics<parallel>], iteration_bounds = array<i64: 1>, scalar_prefetch = 0 : i64, scratch_operands = 0 : i64, tpu.core_type = #tpu.core_type<tc>, window_params = [{transform_indices = @transform_0, window_bounds = array<i64: 4, 400>}, {pipeline_mode = #tpu.pipeline_mode<synchronous>, transform_indices = @transform_1, window_bounds = array<i64: 400, 120>}, {pipeline_mode = #tpu.pipeline_mode<synchronous>, transform_indices = @transform_2, window_bounds = array<i64: 1, 120>}, {pipeline_mode = #tpu.pipeline_mode<synchronous>, transform_indices = @transform_3, window_bounds = array<i64: 120, 84>}, {pipeline_mode = #tpu.pipeline_mode<synchronous>, transform_indices = @transform_4, window_bounds = array<i64: 1, 84>}, {pipeline_mode = #tpu.pipeline_mode<synchronous>, transform_indices = @transform_5, window_bounds = array<i64: 84, 10>}, {pipeline_mode = #tpu.pipeline_mode<synchronous>, transform_indices = @transform_6, window_bounds = array<i64: 1, 10>}, {transform_indices = @transform_7, window_bounds = array<i64: 4, 10>}]} {
    %c0 = arith.constant 0 : index
    %c0_0 = arith.constant 0 : index
    %0 = vector.load %arg1[%c0, %c0_0] : memref<4x400xbf16, #tpu.memory_space<vmem>>, vector<4x400xbf16>
    %c0_1 = arith.constant 0 : index
    %c0_2 = arith.constant 0 : index
    %1 = vector.load %arg2[%c0_1, %c0_2] : memref<400x120xbf16, #tpu.memory_space<vmem>>, vector<400x120xbf16>
    %cst = arith.constant dense<0.000000e+00> : vector<4x120xf32>
    %2 = tpu.matmul %0, %1, %cst {dimension_numbers = #tpu.dot_dimension_numbers<[1], [0], [0], [1], [0, 0, 1, 1], [], []>} : vector<4x400xbf16>, vector<400x120xbf16>, vector<4x120xf32> -> vector<4x120xf32>
    %c0_3 = arith.constant 0 : index
    %c0_4 = arith.constant 0 : index
    %3 = vector.load %arg3[%c0_3, %c0_4] : memref<1x120xf32, #tpu.memory_space<vmem>>, vector<1x120xf32>
    %4 = vector.broadcast %3 : vector<1x120xf32> to vector<4x120xf32>
    %5 = arith.addf %2, %4 : vector<4x120xf32>
    %cst_5 = arith.constant 0.000000e+00 : f32
    %6 = vector.broadcast %cst_5 : f32 to vector<4x120xf32>
    %7 = arith.maximumf %5, %6 : vector<4x120xf32>
    %8 = arith.truncf %7 : vector<4x120xf32> to vector<4x120xbf16>
    %c0_6 = arith.constant 0 : index
    %c0_7 = arith.constant 0 : index
    %9 = vector.load %arg4[%c0_6, %c0_7] : memref<120x84xbf16, #tpu.memory_space<vmem>>, vector<120x84xbf16>
    %cst_8 = arith.constant dense<0.000000e+00> : vector<4x84xf32>
    %10 = tpu.matmul %8, %9, %cst_8 {dimension_numbers = #tpu.dot_dimension_numbers<[1], [0], [0], [1], [0, 0, 1, 1], [], []>} : vector<4x120xbf16>, vector<120x84xbf16>, vector<4x84xf32> -> vector<4x84xf32>
    %c0_9 = arith.constant 0 : index
    %c0_10 = arith.constant 0 : index
    %11 = vector.load %arg5[%c0_9, %c0_10] : memref<1x84xf32, #tpu.memory_space<vmem>>, vector<1x84xf32>
    %12 = vector.broadcast %11 : vector<1x84xf32> to vector<4x84xf32>
    %13 = arith.addf %10, %12 : vector<4x84xf32>
    %cst_11 = arith.constant 0.000000e+00 : f32
    %14 = vector.broadcast %cst_11 : f32 to vector<4x84xf32>
    %15 = arith.maximumf %13, %14 : vector<4x84xf32>
    %16 = arith.truncf %15 : vector<4x84xf32> to vector<4x84xbf16>
    %c0_12 = arith.constant 0 : index
    %c0_13 = arith.constant 0 : index
    %17 = vector.load %arg6[%c0_12, %c0_13] : memref<84x10xbf16, #tpu.memory_space<vmem>>, vector<84x10xbf16>
    %cst_14 = arith.constant dense<0.000000e+00> : vector<4x10xf32>
    %18 = tpu.matmul %16, %17, %cst_14 {dimension_numbers = #tpu.dot_dimension_numbers<[1], [0], [0], [1], [0, 0, 1, 1], [], []>} : vector<4x84xbf16>, vector<84x10xbf16>, vector<4x10xf32> -> vector<4x10xf32>
    %c0_15 = arith.constant 0 : index
    %c0_16 = arith.constant 0 : index
    %19 = vector.load %arg7[%c0_15, %c0_16] : memref<1x10xf32, #tpu.memory_space<vmem>>, vector<1x10xf32>
    %20 = vector.broadcast %19 : vector<1x10xf32> to vector<4x10xf32>
    %21 = arith.addf %18, %20 : vector<4x10xf32>
    %cst_17 = arith.constant dense<0xFF800000> : vector<4xf32>
    %22 = vector.multi_reduction <maximumf>, %21, %cst_17 [1] : vector<4x10xf32> to vector<4xf32>
    %23 = vector.shape_cast %22 : vector<4xf32> to vector<4x1xf32>
    %24 = vector.broadcast %23 : vector<4x1xf32> to vector<4x10xf32>
    %25 = arith.subf %21, %24 : vector<4x10xf32>
    %26 = math.exp %25 : vector<4x10xf32>
    %cst_18 = arith.constant dense<0.000000e+00> : vector<4xf32>
    %27 = vector.multi_reduction <add>, %26, %cst_18 [1] : vector<4x10xf32> to vector<4xf32>
    %28 = vector.shape_cast %27 : vector<4xf32> to vector<4x1xf32>
    %29 = math.log %28 : vector<4x1xf32>
    %30 = vector.broadcast %29 : vector<4x1xf32> to vector<4x10xf32>
    %31 = arith.subf %25, %30 : vector<4x10xf32>
    %c0_19 = arith.constant 0 : index
    %c0_20 = arith.constant 0 : index
    %32 = vector.load %arg8[%c0_19, %c0_20] : memref<4x10xf32, #tpu.memory_space<vmem>>, vector<4x10xf32>
    tpu.vector_store %arg8[%c0_19, %c0_20], %31 {strides = array<i32>} : memref<4x10xf32, #tpu.memory_space<vmem>>, vector<4x10xf32>,
    return
  }
  func.func @transform_0(%arg0: i32) -> (i32, i32) {
    %c0_i32 = arith.constant 0 : i32
    %c0_i32_0 = arith.constant 0 : i32
    return %arg0, %c0_i32 : i32, i32
  }
  func.func @transform_1(%arg0: i32) -> (i32, i32) {
    %c0_i32 = arith.constant 0 : i32
    %c0_i32_0 = arith.constant 0 : i32
    %c0_i32_1 = arith.constant 0 : i32
    return %c0_i32, %c0_i32_0 : i32, i32
  }
  func.func @transform_2(%arg0: i32) -> (i32, i32) {
    %c0_i32 = arith.constant 0 : i32
    %c0_i32_0 = arith.constant 0 : i32
    %c0_i32_1 = arith.constant 0 : i32
    return %c0_i32, %c0_i32_0 : i32, i32
  }
  func.func @transform_3(%arg0: i32) -> (i32, i32) {
    %c0_i32 = arith.constant 0 : i32
    %c0_i32_0 = arith.constant 0 : i32
    %c0_i32_1 = arith.constant 0 : i32
    return %c0_i32, %c0_i32_0 : i32, i32
  }
  func.func @transform_4(%arg0: i32) -> (i32, i32) {
    %c0_i32 = arith.constant 0 : i32
    %c0_i32_0 = arith.constant 0 : i32
    %c0_i32_1 = arith.constant 0 : i32
    return %c0_i32, %c0_i32_0 : i32, i32
  }
  func.func @transform_5(%arg0: i32) -> (i32, i32) {
    %c0_i32 = arith.constant 0 : i32
    %c0_i32_0 = arith.constant 0 : i32
    %c0_i32_1 = arith.constant 0 : i32
    return %c0_i32, %c0_i32_0 : i32, i32
  }
  func.func @transform_6(%arg0: i32) -> (i32, i32) {
    %c0_i32 = arith.constant 0 : i32
    %c0_i32_0 = arith.constant 0 : i32
    %c0_i32_1 = arith.constant 0 : i32
    return %c0_i32, %c0_i32_0 : i32, i32
  }
  func.func @transform_7(%arg0: i32) -> (i32, i32) {
    %c0_i32 = arith.constant 0 : i32
    %c0_i32_0 = arith.constant 0 : i32
    return %arg0, %c0_i32 : i32, i32
  }
}

</mosaic_0001>

<llo_original>
// kernel: lenet5_forward.3
$region0: #{lenet5_forward.3}
  #allocation0 [shape = 'u32[]', space=smem, size = 0x4, offset = 0x4, fixed_abs, tag = 'smem constant byte address 0x4 - core index']
  #allocation1 [shape = 'u32[144,128]{1,0:T(1,128)}', space=vmem, size = 0x12000, scoped, tag = 'internal scratch']
  %s0 = inlined_call_operand.vmem [shape: bf16[4,36,196], index: 0, kind: input, shape index: {}]
  %s1 = inlined_call_operand.vmem [shape: bf16[4,6,36], index: 1, kind: input, shape index: {}]
  %s2 = inlined_call_operand.vmem [shape: f32[6,1], index: 2, kind: input, shape index: {}]
  %s3 = inlined_call_operand.vmem [shape: bf16[4,6,196], index: 3, kind: output, shape index: {}]
  %s4 = sld [smem:[#allocation0]]
  $region22: #{lenet5_forward.3} parent=0
    _
  %s6 = ssub.s32 1, %s4
  %s7 = scalar_select 0, %s6, %s4
  // Predicated region
  $region2: #{lenet5_forward.3} parent=0 // pred_check
    _
  $region3: #{lenet5_forward.3} parent=0 // pred_check_branch
    %9 = sbr.rel (0) target = $region5
  $region4: #{lenet5_forward.3} parent=0 // pred_region
    _
  $region5: #{lenet5_forward.3} parent=0 // pred_fallthru
    _
  // Predicated region
  $region6: #{lenet5_forward.3} parent=0 // pred_check
    _
  $region7: #{lenet5_forward.3} parent=0 // pred_check_branch
    %11 = sbr.rel (0) target = $region9
  $region8: #{lenet5_forward.3} parent=0 // pred_region
    _
  $region9: #{lenet5_forward.3} parent=0 // pred_fallthru
    _
  // Predicated region
  $region10: #{lenet5_forward.3} parent=0 // pred_check
    _
  $region11: #{lenet5_forward.3} parent=0 // pred_check_branch
    %13 = sbr.rel (0) target = $region13
  $region12: #{lenet5_forward.3} parent=0 // pred_region
    _
  $region13: #{lenet5_forward.3} parent=0 // pred_fallthru
    _
  %v15 = vld [vmem:[%s0] sm:$0xff]
  %v16 = vld [vmem:[%s0 + $0x8] sm:$0xff]
  %v17 = vld [vmem:[%s0 + $0x10] sm:$0xff]
  %v18 = vld [vmem:[%s0 + $0x18] sm:$0xff]
  %v19 = vld [vmem:[%s0 + $0x20] sm:$0x33]
  %v20 = vld [vmem:[%s0 + $0x28] sm:$0xff]
  %v21 = vld [vmem:[%s0 + $0x30] sm:$0xff]
  %v22 = vld [vmem:[%s0 + $0x38] sm:$0xff]
  %v23 = vld [vmem:[%s0 + $0x40] sm:$0xff]
  %v24 = vld [vmem:[%s0 + $0x48] sm:$0x33]
  %v25 = vld [vmem:[%s0 + $0x50] sm:$0xff]
  %v26 = vld [vmem:[%s0 + $0x58] sm:$0xff]
  %v27 = vld [vmem:[%s0 + $0x60] sm:$0xff]
  %v28 = vld [vmem:[%s0 + $0x68] sm:$0xff]
  %v29 = vld [vmem:[%s0 + $0x70] sm:$0x33]
  %v30 = vld [vmem:[%s0 + $0x78] sm:$0xff]
  %v31 = vld [vmem:[%s0 + $0x80] sm:$0xff]
  %v32 = vld [vmem:[%s0 + $0x88] sm:$0xff]
  %v33 = vld [vmem:[%s0 + $0x90] sm:$0xff]
  %v34 = vld [vmem:[%s0 + $0x98] sm:$0x33]
  %v35 = vld [vmem:[%s1] sm:$0x7]
  %v41 = vunpack.c.l.b16 %v15
  %v42 = vunpack.c.h.b16 %v15
  %v43 = vunpack.c.l.b16 %v16
  %v44 = vunpack.c.h.b16 %v16
  %v45 = vunpack.c.l.b16 %v17
  %v46 = vunpack.c.h.b16 %v17
  %v47 = vunpack.c.l.b16 %v18
  %v48 = vunpack.c.h.b16 %v18
  %v49 = vunpack.c.l.b16 %v19
  %v50 = vunpack.c.h.b16 %v19
  %v51 = vpack.c.b16 %v43, %v41
  %v52 = vpack.c.b16 %v44, %v42
  %v53 = vpack.c.b16 %v47, %v45
  %v54 = vpack.c.b16 %v48, %v46
  %v55 = vpack.c.b16 %v49, %v49
  %v56 = vpack.c.b16 %v50, %v50
  %vm61 = vcmask 293888
  %v63 = vsel %vm61, %v35, 0
  %vm65 = vcmask 1041408
  %v67 = vsel %vm65, %v55, 0
  %v70 = vsel %vm65, %v56, 0
  %72 = vmatprep.subr.bf16.mxu0 %v52
  %73 = vmatpush1.bf16.msra.mxu0 %v51
  %74 = vmatprep.subr.bf16.mxu0 %v54
  %75 = vmatpush1.bf16.msra.mxu0 %v53
  %76 = vmatprep.subr.bf16.mxu0 %v70
  %77 = vmatpush1.bf16.msra.mxu0 %v67
  %78 = vmatprep.subr.bf16.mxu0 0
  %79 = vmatpush1.bf16.msra.mxu0 0
  %80 = vmatprep.subr.bf16.mxu0 0
  %81 = vmatpush1.bf16.msra.mxu0 0
  %82 = vmatprep.subr.bf16.mxu0 0
  %83 = vmatpush1.bf16.msra.mxu0 0
  %84 = vmatprep.subr.bf16.mxu0 0
  %85 = vmatpush1.bf16.msra.mxu0 0
  %86 = vmatprep.subr.bf16.mxu0 0
  %87 = vmatpush1.bf16.msra.mxu0 0
  %88 = vmatprep.subr.bf16.mxu0 0
  %89 = vmatpush1.bf16.msra.mxu0 0
  %90 = vmatprep.subr.bf16.mxu0 0
  %91 = vmatpush1.bf16.msra.mxu0 0
  %92 = vmatprep.subr.bf16.mxu0 0
  %93 = vmatpush1.bf16.msra.mxu0 0
  %94 = vmatprep.subr.bf16.mxu0 0
  %95 = vmatpush1.bf16.msra.mxu0 0
  %96 = vmatprep.subr.bf16.mxu0 0
  %97 = vmatpush1.bf16.msra.mxu0 0
  %98 = vmatprep.subr.bf16.mxu0 0
  %99 = vmatpush1.bf16.msra.mxu0 0
  %100 = vmatprep.subr.bf16.mxu0 0
  %101 = vmatpush1.bf16.msra.mxu0 0
  %102 = vmatprep.subr.bf16.mxu0 0
  %103 = vmatpush1.bf16.msra.mxu0 0
  %104 = vmatprep.mubr.bf16.mxu0 0
  %105 = vmatmul.mubr.bf16.gmra.mrb[0].mxu0 %v63
  %v106 = vpop.f32.mrb[0].mxu0
  %v107 = vadd.f32 0.0, %v106
  %v108 = vpop.f32.mrb[0].mxu0
  %v109 = vadd.f32 0.0, %v108
  %v110 = vpop.f32.mrb[0].mxu0
  %v111 = vpop.f32.mrb[0].mxu0
  %112 = vdwg.mxu0
  %v118 = vunpack.c.l.b16 %v20
  %v119 = vunpack.c.h.b16 %v20
  %v120 = vunpack.c.l.b16 %v21
  %v121 = vunpack.c.h.b16 %v21
  %v122 = vunpack.c.l.b16 %v22
  %v123 = vunpack.c.h.b16 %v22
  %v124 = vunpack.c.l.b16 %v23
  %v125 = vunpack.c.h.b16 %v23
  %v126 = vunpack.c.l.b16 %v24
  %v127 = vunpack.c.h.b16 %v24
  %v128 = vpack.c.b16 %v120, %v118
  %v129 = vpack.c.b16 %v121, %v119
  %v130 = vpack.c.b16 %v124, %v122
  %v131 = vpack.c.b16 %v125, %v123
  %v132 = vpack.c.b16 %v126, %v126
  %v133 = vpack.c.b16 %v127, %v127
  %v139 = vsel %vm65, %v132, 0
  %v142 = vsel %vm65, %v133, 0
  %144 = vmatprep.subr.bf16.mxu0 %v129
  %145 = vmatpush1.bf16.msra.mxu0 %v128
  %146 = vmatprep.subr.bf16.mxu0 %v131
  %147 = vmatpush1.bf16.msra.mxu0 %v130
  %148 = vmatprep.subr.bf16.mxu0 %v142
  %149 = vmatpush1.bf16.msra.mxu0 %v139
  %150 = vmatprep.subr.bf16.mxu0 0
  %151 = vmatpush1.bf16.msra.mxu0 0
  %152 = vmatprep.subr.bf16.mxu0 0
  %153 = vmatpush1.bf16.msra.mxu0 0
  %154 = vmatprep.subr.bf16.mxu0 0
  %155 = vmatpush1.bf16.msra.mxu0 0
  %156 = vmatprep.subr.bf16.mxu0 0
  %157 = vmatpush1.bf16.msra.mxu0 0
  %158 = vmatprep.subr.bf16.mxu0 0
  %159 = vmatpush1.bf16.msra.mxu0 0
  %160 = vmatprep.subr.bf16.mxu0 0
  %161 = vmatpush1.bf16.msra.mxu0 0
  %162 = vmatprep.subr.bf16.mxu0 0
  %163 = vmatpush1.bf16.msra.mxu0 0
  %164 = vmatprep.subr.bf16.mxu0 0
  %165 = vmatpush1.bf16.msra.mxu0 0
  %166 = vmatprep.subr.bf16.mxu0 0
  %167 = vmatpush1.bf16.msra.mxu0 0
  %168 = vmatprep.subr.bf16.mxu0 0
  %169 = vmatpush1.bf16.msra.mxu0 0
  %170 = vmatprep.subr.bf16.mxu0 0
  %171 = vmatpush1.bf16.msra.mxu0 0
  %172 = vmatprep.subr.bf16.mxu0 0
  %173 = vmatpush1.bf16.msra.mxu0 0
  %174 = vmatprep.subr.bf16.mxu0 0
  %175 = vmatpush1.bf16.msra.mxu0 0
  %176 = vmatprep.mubr.bf16.mxu0 0
  %177 = vmatmul.mubr.bf16.gmra.mrb[0].mxu0 %v63
  %v178 = vpop.f32.mrb[0].mxu0
  %v179 = vadd.f32 0.0, %v178
  %v180 = vpop.f32.mrb[0].mxu0
  %v181 = vadd.f32 0.0, %v180
  %v182 = vpop.f32.mrb[0].mxu0
  %v183 = vpop.f32.mrb[0].mxu0
  %184 = vdwg.mxu0
  %v190 = vunpack.c.l.b16 %v25
  %v191 = vunpack.c.h.b16 %v25
  %v192 = vunpack.c.l.b16 %v26
  %v193 = vunpack.c.h.b16 %v26
  %v194 = vunpack.c.l.b16 %v27
  %v195 = vunpack.c.h.b16 %v27
  %v196 = vunpack.c.l.b16 %v28
  %v197 = vunpack.c.h.b16 %v28
  %v198 = vunpack.c.l.b16 %v29
  %v199 = vunpack.c.h.b16 %v29
  %v200 = vpack.c.b16 %v192, %v190
  %v201 = vpack.c.b16 %v193, %v191
  %v202 = vpack.c.b16 %v196, %v194
  %v203 = vpack.c.b16 %v197, %v195
  %v204 = vpack.c.b16 %v198, %v198
  %v205 = vpack.c.b16 %v199, %v199
  %v211 = vsel %vm65, %v204, 0
  %v214 = vsel %vm65, %v205, 0
  %216 = vmatprep.subr.bf16.mxu0 %v201
  %217 = vmatpush1.bf16.msra.mxu0 %v200
  %218 = vmatprep.subr.bf16.mxu0 %v203
  %219 = vmatpush1.bf16.msra.mxu0 %v202
  %220 = vmatprep.subr.bf16.mxu0 %v214
  %221 = vmatpush1.bf16.msra.mxu0 %v211
  %222 = vmatprep.subr.bf16.mxu0 0
  %223 = vmatpush1.bf16.msra.mxu0 0
  %224 = vmatprep.subr.bf16.mxu0 0
  %225 = vmatpush1.bf16.msra.mxu0 0
  %226 = vmatprep.subr.bf16.mxu0 0
  %227 = vmatpush1.bf16.msra.mxu0 0
  %228 = vmatprep.subr.bf16.mxu0 0
  %229 = vmatpush1.bf16.msra.mxu0 0
  %230 = vmatprep.subr.bf16.mxu0 0
  %231 = vmatpush1.bf16.msra.mxu0 0
  %232 = vmatprep.subr.bf16.mxu0 0
  %233 = vmatpush1.bf16.msra.mxu0 0
  %234 = vmatprep.subr.bf16.mxu0 0
  %235 = vmatpush1.bf16.msra.mxu0 0
  %236 = vmatprep.subr.bf16.mxu0 0
  %237 = vmatpush1.bf16.msra.mxu0 0
  %238 = vmatprep.subr.bf16.mxu0 0
  %239 = vmatpush1.bf16.msra.mxu0 0
  %240 = vmatprep.subr.bf16.mxu0 0
  %241 = vmatpush1.bf16.msra.mxu0 0
  %242 = vmatprep.subr.bf16.mxu0 0
  %243 = vmatpush1.bf16.msra.mxu0 0
  %244 = vmatprep.subr.bf16.mxu0 0
  %245 = vmatpush1.bf16.msra.mxu0 0
  %246 = vmatprep.subr.bf16.mxu0 0
  %247 = vmatpush1.bf16.msra.mxu0 0
  %248 = vmatprep.mubr.bf16.mxu0 0
  %249 = vmatmul.mubr.bf16.gmra.mrb[0].mxu0 %v63
  %v250 = vpop.f32.mrb[0].mxu0
  %v251 = vadd.f32 0.0, %v250
  %v252 = vpop.f32.mrb[0].mxu0
  %v253 = vadd.f32 0.0, %v252
  %v254 = vpop.f32.mrb[0].mxu0
  %v255 = vpop.f32.mrb[0].mxu0
  %256 = vdwg.mxu0
  %v262 = vunpack.c.l.b16 %v30
  %v263 = vunpack.c.h.b16 %v30
  %v264 = vunpack.c.l.b16 %v31
  %v265 = vunpack.c.h.b16 %v31
  %v266 = vunpack.c.l.b16 %v32
  %v267 = vunpack.c.h.b16 %v32
  %v268 = vunpack.c.l.b16 %v33
  %v269 = vunpack.c.h.b16 %v33
  %v270 = vunpack.c.l.b16 %v34
  %v271 = vunpack.c.h.b16 %v34
  %v272 = vpack.c.b16 %v264, %v262
  %v273 = vpack.c.b16 %v265, %v263
  %v274 = vpack.c.b16 %v268, %v266
  %v275 = vpack.c.b16 %v269, %v267
  %v276 = vpack.c.b16 %v270, %v270
  %v277 = vpack.c.b16 %v271, %v271
  %v283 = vsel %vm65, %v276, 0
  %v286 = vsel %vm65, %v277, 0
  %288 = vmatprep.subr.bf16.mxu0 %v273
  %289 = vmatpush1.bf16.msra.mxu0 %v272
  %290 = vmatprep.subr.bf16.mxu0 %v275
  %291 = vmatpush1.bf16.msra.mxu0 %v274
  %292 = vmatprep.subr.bf16.mxu0 %v286
  %293 = vmatpush1.bf16.msra.mxu0 %v283
  %294 = vmatprep.subr.bf16.mxu0 0
  %295 = vmatpush1.bf16.msra.mxu0 0
  %296 = vmatprep.subr.bf16.mxu0 0
  %297 = vmatpush1.bf16.msra.mxu0 0
  %298 = vmatprep.subr.bf16.mxu0 0
  %299 = vmatpush1.bf16.msra.mxu0 0
  %300 = vmatprep.subr.bf16.mxu0 0
  %301 = vmatpush1.bf16.msra.mxu0 0
  %302 = vmatprep.subr.bf16.mxu0 0
  %303 = vmatpush1.bf16.msra.mxu0 0
  %304 = vmatprep.subr.bf16.mxu0 0
  %305 = vmatpush1.bf16.msra.mxu0 0
  %306 = vmatprep.subr.bf16.mxu0 0
  %307 = vmatpush1.bf16.msra.mxu0 0
  %308 = vmatprep.subr.bf16.mxu0 0
  %309 = vmatpush1.bf16.msra.mxu0 0
  %310 = vmatprep.subr.bf16.mxu0 0
  %311 = vmatpush1.bf16.msra.mxu0 0
  %312 = vmatprep.subr.bf16.mxu0 0
  %313 = vmatpush1.bf16.msra.mxu0 0
  %314 = vmatprep.subr.bf16.mxu0 0
  %315 = vmatpush1.bf16.msra.mxu0 0
  %316 = vmatprep.subr.bf16.mxu0 0
  %317 = vmatpush1.bf16.msra.mxu0 0
  %318 = vmatprep.subr.bf16.mxu0 0
  %319 = vmatpush1.bf16.msra.mxu0 0
  %320 = vmatprep.mubr.bf16.mxu0 0
  %321 = vmatmul.mubr.bf16.gmra.mrb[0].mxu0 %v63
  %v322 = vpop.f32.mrb[0].mxu0
  %v323 = vadd.f32 0.0, %v322
  %v324 = vpop.f32.mrb[0].mxu0
  %v325 = vadd.f32 0.0, %v324
  %v326 = vpop.f32.mrb[0].mxu0
  %v327 = vpop.f32.mrb[0].mxu0
  %328 = vdwg.mxu0
  %s329 = scalar_lea.vmem %s1, 4
  %v330 = vld [vmem:[%s329] sm:$0x7]
  %v332 = vsel %vm61, %v330, 0
  %334 = vmatprep.subr.bf16.mxu0 %v52
  %335 = vmatpush1.bf16.msra.mxu0 %v51
  %336 = vmatprep.subr.bf16.mxu0 %v54
  %337 = vmatpush1.bf16.msra.mxu0 %v53
  %338 = vmatprep.subr.bf16.mxu0 %v70
  %339 = vmatpush1.bf16.msra.mxu0 %v67
  %340 = vmatprep.subr.bf16.mxu0 0
  %341 = vmatpush1.bf16.msra.mxu0 0
  %342 = vmatprep.subr.bf16.mxu0 0
  %343 = vmatpush1.bf16.msra.mxu0 0
  %344 = vmatprep.subr.bf16.mxu0 0
  %345 = vmatpush1.bf16.msra.mxu0 0
  %346 = vmatprep.subr.bf16.mxu0 0
  %347 = vmatpush1.bf16.msra.mxu0 0
  %348 = vmatprep.subr.bf16.mxu0 0
  %349 = vmatpush1.bf16.msra.mxu0 0
  %350 = vmatprep.subr.bf16.mxu0 0
  %351 = vmatpush1.bf16.msra.mxu0 0
  %352 = vmatprep.subr.bf16.mxu0 0
  %353 = vmatpush1.bf16.msra.mxu0 0
  %354 = vmatprep.subr.bf16.mxu0 0
  %355 = vmatpush1.bf16.msra.mxu0 0
  %356 = vmatprep.subr.bf16.mxu0 0
  %357 = vmatpush1.bf16.msra.mxu0 0
  %358 = vmatprep.subr.bf16.mxu0 0
  %359 = vmatpush1.bf16.msra.mxu0 0
  %360 = vmatprep.subr.bf16.mxu0 0
  %361 = vmatpush1.bf16.msra.mxu0 0
  %362 = vmatprep.subr.bf16.mxu0 0
  %363 = vmatpush1.bf16.msra.mxu0 0
  %364 = vmatprep.subr.bf16.mxu0 0
  %365 = vmatpush1.bf16.msra.mxu0 0
  %366 = vmatprep.mubr.bf16.mxu0 0
  %367 = vmatmul.mubr.bf16.gmra.mrb[0].mxu0 %v332
  %v368 = vpop.f32.mrb[0].mxu0
  %v369 = vadd.f32 0.0, %v368
  %v370 = vpop.f32.mrb[0].mxu0
  %v371 = vadd.f32 0.0, %v370
  %v372 = vpop.f32.mrb[0].mxu0
  %v373 = vpop.f32.mrb[0].mxu0
  %374 = vdwg.mxu0
  %375 = vmatprep.subr.bf16.mxu0 %v129
  %376 = vmatpush1.bf16.msra.mxu0 %v128
  %377 = vmatprep.subr.bf16.mxu0 %v131
  %378 = vmatpush1.bf16.msra.mxu0 %v130
  %379 = vmatprep.subr.bf16.mxu0 %v142
  %380 = vmatpush1.bf16.msra.mxu0 %v139
  %381 = vmatprep.subr.bf16.mxu0 0
  %382 = vmatpush1.bf16.msra.mxu0 0
  %383 = vmatprep.subr.bf16.mxu0 0
  %384 = vmatpush1.bf16.msra.mxu0 0
  %385 = vmatprep.subr.bf16.mxu0 0
  %386 = vmatpush1.bf16.msra.mxu0 0
  %387 = vmatprep.subr.bf16.mxu0 0
  %388 = vmatpush1.bf16.msra.mxu0 0
  %389 = vmatprep.subr.bf16.mxu0 0
  %390 = vmatpush1.bf16.msra.mxu0 0
  %391 = vmatprep.subr.bf16.mxu0 0
  %392 = vmatpush1.bf16.msra.mxu0 0
  %393 = vmatprep.subr.bf16.mxu0 0
  %394 = vmatpush1.bf16.msra.mxu0 0
  %395 = vmatprep.subr.bf16.mxu0 0
  %396 = vmatpush1.bf16.msra.mxu0 0
  %397 = vmatprep.subr.bf16.mxu0 0
  %398 = vmatpush1.bf16.msra.mxu0 0
  %399 = vmatprep.subr.bf16.mxu0 0
  %400 = vmatpush1.bf16.msra.mxu0 0
  %401 = vmatprep.subr.bf16.mxu0 0
  %402 = vmatpush1.bf16.msra.mxu0 0
  %403 = vmatprep.subr.bf16.mxu0 0
  %404 = vmatpush1.bf16.msra.mxu0 0
  %405 = vmatprep.subr.bf16.mxu0 0
  %406 = vmatpush1.bf16.msra.mxu0 0
  %407 = vmatprep.mubr.bf16.mxu0 0
  %408 = vmatmul.mubr.bf16.gmra.mrb[0].mxu0 %v332
  %v409 = vpop.f32.mrb[0].mxu0
  %v410 = vadd.f32 0.0, %v409
  %v411 = vpop.f32.mrb[0].mxu0
  %v412 = vadd.f32 0.0, %v411
  %v413 = vpop.f32.mrb[0].mxu0
  %v414 = vpop.f32.mrb[0].mxu0
  %415 = vdwg.mxu0
  %416 = vmatprep.subr.bf16.mxu0 %v201
  %417 = vmatpush1.bf16.msra.mxu0 %v200
  %418 = vmatprep.subr.bf16.mxu0 %v203
  %419 = vmatpush1.bf16.msra.mxu0 %v202
  %420 = vmatprep.subr.bf16.mxu0 %v214
  %421 = vmatpush1.bf16.msra.mxu0 %v211
  %422 = vmatprep.subr.bf16.mxu0 0
  %423 = vmatpush1.bf16.msra.mxu0 0
  %424 = vmatprep.subr.bf16.mxu0 0
  %425 = vmatpush1.bf16.msra.mxu0 0
  %426 = vmatprep.subr.bf16.mxu0 0
  %427 = vmatpush1.bf16.msra.mxu0 0
  %428 = vmatprep.subr.bf16.mxu0 0
  %429 = vmatpush1.bf16.msra.mxu0 0
  %430 = vmatprep.subr.bf16.mxu0 0
  %431 = vmatpush1.bf16.msra.mxu0 0
  %432 = vmatprep.subr.bf16.mxu0 0
  %433 = vmatpush1.bf16.msra.mxu0 0
  %434 = vmatprep.subr.bf16.mxu0 0
  %435 = vmatpush1.bf16.msra.mxu0 0
  %436 = vmatprep.subr.bf16.mxu0 0
  %437 = vmatpush1.bf16.msra.mxu0 0
  %438 = vmatprep.subr.bf16.mxu0 0
  %439 = vmatpush1.bf16.msra.mxu0 0
  %440 = vmatprep.subr.bf16.mxu0 0
  %441 = vmatpush1.bf16.msra.mxu0 0
  %442 = vmatprep.subr.bf16.mxu0 0
  %443 = vmatpush1.bf16.msra.mxu0 0
  %444 = vmatprep.subr.bf16.mxu0 0
  %445 = vmatpush1.bf16.msra.mxu0 0
  %446 = vmatprep.subr.bf16.mxu0 0
  %447 = vmatpush1.bf16.msra.mxu0 0
  %448 = vmatprep.mubr.bf16.mxu0 0
  %449 = vmatmul.mubr.bf16.gmra.mrb[0].mxu0 %v332
  %v450 = vpop.f32.mrb[0].mxu0
  %v451 = vadd.f32 0.0, %v450
  %v452 = vpop.f32.mrb[0].mxu0
  %v453 = vadd.f32 0.0, %v452
  %v454 = vpop.f32.mrb[0].mxu0
  %v455 = vpop.f32.mrb[0].mxu0
  %456 = vdwg.mxu0
  %457 = vmatprep.subr.bf16.mxu0 %v273
  %458 = vmatpush1.bf16.msra.mxu0 %v272
  %459 = vmatprep.subr.bf16.mxu0 %v275
  %460 = vmatpush1.bf16.msra.mxu0 %v274
  %461 = vmatprep.subr.bf16.mxu0 %v286
  %462 = vmatpush1.bf16.msra.mxu0 %v283
  %463 = vmatprep.subr.bf16.mxu0 0
  %464 = vmatpush1.bf16.msra.mxu0 0
  %465 = vmatprep.subr.bf16.mxu0 0
  %466 = vmatpush1.bf16.msra.mxu0 0
  %467 = vmatprep.subr.bf16.mxu0 0
  %468 = vmatpush1.bf16.msra.mxu0 0
  %469 = vmatprep.subr.bf16.mxu0 0
  %470 = vmatpush1.bf16.msra.mxu0 0
  %471 = vmatprep.subr.bf16.mxu0 0
  %472 = vmatpush1.bf16.msra.mxu0 0
  %473 = vmatprep.subr.bf16.mxu0 0
  %474 = vmatpush1.bf16.msra.mxu0 0
  %475 = vmatprep.subr.bf16.mxu0 0
  %476 = vmatpush1.bf16.msra.mxu0 0
  %477 = vmatprep.subr.bf16.mxu0 0
  %478 = vmatpush1.bf16.msra.mxu0 0
  %479 = vmatprep.subr.bf16.mxu0 0
  %480 = vmatpush1.bf16.msra.mxu0 0
  %481 = vmatprep.subr.bf16.mxu0 0
  %482 = vmatpush1.bf16.msra.mxu0 0
  %483 = vmatprep.subr.bf16.mxu0 0
  %484 = vmatpush1.bf16.msra.mxu0 0
  %485 = vmatprep.subr.bf16.mxu0 0
  %486 = vmatpush1.bf16.msra.mxu0 0
  %487 = vmatprep.subr.bf16.mxu0 0
  %488 = vmatpush1.bf16.msra.mxu0 0
  %489 = vmatprep.mubr.bf16.mxu0 0
  %490 = vmatmul.mubr.bf16.gmra.mrb[0].mxu0 %v332
  %v491 = vpop.f32.mrb[0].mxu0
  %v492 = vadd.f32 0.0, %v491
  %v493 = vpop.f32.mrb[0].mxu0
  %v494 = vadd.f32 0.0, %v493
  %v495 = vpop.f32.mrb[0].mxu0
  %v496 = vpop.f32.mrb[0].mxu0
  %497 = vdwg.mxu0
  %v498 = vmax.f32 %v107, %v369
  %v499 = vmax.f32 %v109, %v371
  %v500 = vmax.f32 %v179, %v410
  %v501 = vmax.f32 %v181, %v412
  %v502 = vmax.f32 %v251, %v451
  %v503 = vmax.f32 %v253, %v453
  %v504 = vmax.f32 %v323, %v492
  %v505 = vmax.f32 %v325, %v494
  %s506 = scalar_lea.vmem %s1, 8
  %v507 = vld [vmem:[%s506] sm:$0x7]
  %v509 = vsel %vm61, %v507, 0
  %511 = vmatprep.subr.bf16.mxu0 %v52
  %512 = vmatpush1.bf16.msra.mxu0 %v51
  %513 = vmatprep.subr.bf16.mxu0 %v54
  %514 = vmatpush1.bf16.msra.mxu0 %v53
  %515 = vmatprep.subr.bf16.mxu0 %v70
  %516 = vmatpush1.bf16.msra.mxu0 %v67
  %517 = vmatprep.subr.bf16.mxu0 0
  %518 = vmatpush1.bf16.msra.mxu0 0
  %519 = vmatprep.subr.bf16.mxu0 0
  %520 = vmatpush1.bf16.msra.mxu0 0
  %521 = vmatprep.subr.bf16.mxu0 0
  %522 = vmatpush1.bf16.msra.mxu0 0
  %523 = vmatprep.subr.bf16.mxu0 0
  %524 = vmatpush1.bf16.msra.mxu0 0
  %525 = vmatprep.subr.bf16.mxu0 0
  %526 = vmatpush1.bf16.msra.mxu0 0
  %527 = vmatprep.subr.bf16.mxu0 0
  %528 = vmatpush1.bf16.msra.mxu0 0
  %529 = vmatprep.subr.bf16.mxu0 0
  %530 = vmatpush1.bf16.msra.mxu0 0
  %531 = vmatprep.subr.bf16.mxu0 0
  %532 = vmatpush1.bf16.msra.mxu0 0
  %533 = vmatprep.subr.bf16.mxu0 0
  %534 = vmatpush1.bf16.msra.mxu0 0
  %535 = vmatprep.subr.bf16.mxu0 0
  %536 = vmatpush1.bf16.msra.mxu0 0
  %537 = vmatprep.subr.bf16.mxu0 0
  %538 = vmatpush1.bf16.msra.mxu0 0
  %539 = vmatprep.subr.bf16.mxu0 0
  %540 = vmatpush1.bf16.msra.mxu0 0
  %541 = vmatprep.subr.bf16.mxu0 0
  %542 = vmatpush1.bf16.msra.mxu0 0
  %543 = vmatprep.mubr.bf16.mxu0 0
  %544 = vmatmul.mubr.bf16.gmra.mrb[0].mxu0 %v509
  %v545 = vpop.f32.mrb[0].mxu0
  %v546 = vadd.f32 0.0, %v545
  %v547 = vpop.f32.mrb[0].mxu0
  %v548 = vadd.f32 0.0, %v547
  %v549 = vpop.f32.mrb[0].mxu0
  %v550 = vpop.f32.mrb[0].mxu0
  %551 = vdwg.mxu0
  %552 = vmatprep.subr.bf16.mxu0 %v129
  %553 = vmatpush1.bf16.msra.mxu0 %v128
  %554 = vmatprep.subr.bf16.mxu0 %v131
  %555 = vmatpush1.bf16.msra.mxu0 %v130
  %556 = vmatprep.subr.bf16.mxu0 %v142
  %557 = vmatpush1.bf16.msra.mxu0 %v139
  %558 = vmatprep.subr.bf16.mxu0 0
  %559 = vmatpush1.bf16.msra.mxu0 0
  %560 = vmatprep.subr.bf16.mxu0 0
  %561 = vmatpush1.bf16.msra.mxu0 0
  %562 = vmatprep.subr.bf16.mxu0 0
  %563 = vmatpush1.bf16.msra.mxu0 0
  %564 = vmatprep.subr.bf16.mxu0 0
  %565 = vmatpush1.bf16.msra.mxu0 0
  %566 = vmatprep.subr.bf16.mxu0 0
  %567 = vmatpush1.bf16.msra.mxu0 0
  %568 = vmatprep.subr.bf16.mxu0 0
  %569 = vmatpush1.bf16.msra.mxu0 0
  %570 = vmatprep.subr.bf16.mxu0 0
  %571 = vmatpush1.bf16.msra.mxu0 0
  %572 = vmatprep.subr.bf16.mxu0 0
  %573 = vmatpush1.bf16.msra.mxu0 0
  %574 = vmatprep.subr.bf16.mxu0 0
  %575 = vmatpush1.bf16.msra.mxu0 0
  %576 = vmatprep.subr.bf16.mxu0 0
  %577 = vmatpush1.bf16.msra.mxu0 0
  %578 = vmatprep.subr.bf16.mxu0 0
  %579 = vmatpush1.bf16.msra.mxu0 0
  %580 = vmatprep.subr.bf16.mxu0 0
  %581 = vmatpush1.bf16.msra.mxu0 0
  %582 = vmatprep.subr.bf16.mxu0 0
  %583 = vmatpush1.bf16.msra.mxu0 0
  %584 = vmatprep.mubr.bf16.mxu0 0
  %585 = vmatmul.mubr.bf16.gmra.mrb[0].mxu0 %v509
  %v586 = vpop.f32.mrb[0].mxu0
  %v587 = vadd.f32 0.0, %v586
  %v588 = vpop.f32.mrb[0].mxu0
  %v589 = vadd.f32 0.0, %v588
  %v590 = vpop.f32.mrb[0].mxu0
  %v591 = vpop.f32.mrb[0].mxu0
  %592 = vdwg.mxu0
  %593 = vmatprep.subr.bf16.mxu0 %v201
  %594 = vmatpush1.bf16.msra.mxu0 %v200
  %595 = vmatprep.subr.bf16.mxu0 %v203
  %596 = vmatpush1.bf16.msra.mxu0 %v202
  %597 = vmatprep.subr.bf16.mxu0 %v214
  %598 = vmatpush1.bf16.msra.mxu0 %v211
  %599 = vmatprep.subr.bf16.mxu0 0
  %600 = vmatpush1.bf16.msra.mxu0 0
  %601 = vmatprep.subr.bf16.mxu0 0
  %602 = vmatpush1.bf16.msra.mxu0 0
  %603 = vmatprep.subr.bf16.mxu0 0
  %604 = vmatpush1.bf16.msra.mxu0 0
  %605 = vmatprep.subr.bf16.mxu0 0
  %606 = vmatpush1.bf16.msra.mxu0 0
  %607 = vmatprep.subr.bf16.mxu0 0
  %608 = vmatpush1.bf16.msra.mxu0 0
  %609 = vmatprep.subr.bf16.mxu0 0
  %610 = vmatpush1.bf16.msra.mxu0 0
  %611 = vmatprep.subr.bf16.mxu0 0
  %612 = vmatpush1.bf16.msra.mxu0 0
  %613 = vmatprep.subr.bf16.mxu0 0
  %614 = vmatpush1.bf16.msra.mxu0 0
  %615 = vmatprep.subr.bf16.mxu0 0
  %616 = vmatpush1.bf16.msra.mxu0 0
  %617 = vmatprep.subr.bf16.mxu0 0
  %618 = vmatpush1.bf16.msra.mxu0 0
  %619 = vmatprep.subr.bf16.mxu0 0
  %620 = vmatpush1.bf16.msra.mxu0 0
  %621 = vmatprep.subr.bf16.mxu0 0
  %622 = vmatpush1.bf16.msra.mxu0 0
  %623 = vmatprep.subr.bf16.mxu0 0
  %624 = vmatpush1.bf16.msra.mxu0 0
  %625 = vmatprep.mubr.bf16.mxu0 0
  %626 = vmatmul.mubr.bf16.gmra.mrb[0].mxu0 %v509
  %v627 = vpop.f32.mrb[0].mxu0
  %v628 = vadd.f32 0.0, %v627
  %v629 = vpop.f32.mrb[0].mxu0
  %v630 = vadd.f32 0.0, %v629
  %v631 = vpop.f32.mrb[0].mxu0
  %v632 = vpop.f32.mrb[0].mxu0
  %633 = vdwg.mxu0
  %634 = vmatprep.subr.bf16.mxu0 %v273
  %635 = vmatpush1.bf16.msra.mxu0 %v272
  %636 = vmatprep.subr.bf16.mxu0 %v275
  %637 = vmatpush1.bf16.msra.mxu0 %v274
  %638 = vmatprep.subr.bf16.mxu0 %v286
  %639 = vmatpush1.bf16.msra.mxu0 %v283
  %640 = vmatprep.subr.bf16.mxu0 0
  %641 = vmatpush1.bf16.msra.mxu0 0
  %642 = vmatprep.subr.bf16.mxu0 0
  %643 = vmatpush1.bf16.msra.mxu0 0
  %644 = vmatprep.subr.bf16.mxu0 0
  %645 = vmatpush1.bf16.msra.mxu0 0
  %646 = vmatprep.subr.bf16.mxu0 0
  %647 = vmatpush1.bf16.msra.mxu0 0
  %648 = vmatprep.subr.bf16.mxu0 0
  %649 = vmatpush1.bf16.msra.mxu0 0
  %650 = vmatprep.subr.bf16.mxu0 0
  %651 = vmatpush1.bf16.msra.mxu0 0
  %652 = vmatprep.subr.bf16.mxu0 0
  %653 = vmatpush1.bf16.msra.mxu0 0
  %654 = vmatprep.subr.bf16.mxu0 0
  %655 = vmatpush1.bf16.msra.mxu0 0
  %656 = vmatprep.subr.bf16.mxu0 0
  %657 = vmatpush1.bf16.msra.mxu0 0
  %658 = vmatprep.subr.bf16.mxu0 0
  %659 = vmatpush1.bf16.msra.mxu0 0
  %660 = vmatprep.subr.bf16.mxu0 0
  %661 = vmatpush1.bf16.msra.mxu0 0
  %662 = vmatprep.subr.bf16.mxu0 0
  %663 = vmatpush1.bf16.msra.mxu0 0
  %664 = vmatprep.subr.bf16.mxu0 0
  %665 = vmatpush1.bf16.msra.mxu0 0
  %666 = vmatprep.mubr.bf16.mxu0 0
  %667 = vmatmul.mubr.bf16.gmra.mrb[0].mxu0 %v509
  %v668 = vpop.f32.mrb[0].mxu0
  %v669 = vadd.f32 0.0, %v668
  %v670 = vpop.f32.mrb[0].mxu0
  %v671 = vadd.f32 0.0, %v670
  %v672 = vpop.f32.mrb[0].mxu0
  %v673 = vpop.f32.mrb[0].mxu0
  %674 = vdwg.mxu0
  %s675 = scalar_lea.vmem %s1, 12
  %v676 = vld [vmem:[%s675] sm:$0x7]
  %v678 = vsel %vm61, %v676, 0
  %680 = vmatprep.subr.bf16.mxu0 %v52
  %681 = vmatpush1.bf16.msra.mxu0 %v51
  %682 = vmatprep.subr.bf16.mxu0 %v54
  %683 = vmatpush1.bf16.msra.mxu0 %v53
  %684 = vmatprep.subr.bf16.mxu0 %v70
  %685 = vmatpush1.bf16.msra.mxu0 %v67
  %686 = vmatprep.subr.bf16.mxu0 0
  %687 = vmatpush1.bf16.msra.mxu0 0
  %688 = vmatprep.subr.bf16.mxu0 0
  %689 = vmatpush1.bf16.msra.mxu0 0
  %690 = vmatprep.subr.bf16.mxu0 0
  %691 = vmatpush1.bf16.msra.mxu0 0
  %692 = vmatprep.subr.bf16.mxu0 0
  %693 = vmatpush1.bf16.msra.mxu0 0
  %694 = vmatprep.subr.bf16.mxu0 0
  %695 = vmatpush1.bf16.msra.mxu0 0
  %696 = vmatprep.subr.bf16.mxu0 0
  %697 = vmatpush1.bf16.msra.mxu0 0
  %698 = vmatprep.subr.bf16.mxu0 0
  %699 = vmatpush1.bf16.msra.mxu0 0
  %700 = vmatprep.subr.bf16.mxu0 0
  %701 = vmatpush1.bf16.msra.mxu0 0
  %702 = vmatprep.subr.bf16.mxu0 0
  %703 = vmatpush1.bf16.msra.mxu0 0
  %704 = vmatprep.subr.bf16.mxu0 0
  %705 = vmatpush1.bf16.msra.mxu0 0
  %706 = vmatprep.subr.bf16.mxu0 0
  %707 = vmatpush1.bf16.msra.mxu0 0
  %708 = vmatprep.subr.bf16.mxu0 0
  %709 = vmatpush1.bf16.msra.mxu0 0
  %710 = vmatprep.subr.bf16.mxu0 0
  %711 = vmatpush1.bf16.msra.mxu0 0
  %712 = vmatprep.mubr.bf16.mxu0 0
  %713 = vmatmul.mubr.bf16.gmra.mrb[0].mxu0 %v678
  %v714 = vpop.f32.mrb[0].mxu0
  %v715 = vadd.f32 0.0, %v714
  %v716 = vpop.f32.mrb[0].mxu0
  %v717 = vadd.f32 0.0, %v716
  %v718 = vpop.f32.mrb[0].mxu0
  %v719 = vpop.f32.mrb[0].mxu0
  %720 = vdwg.mxu0
  %721 = vmatprep.subr.bf16.mxu0 %v129
  %722 = vmatpush1.bf16.msra.mxu0 %v128
  %723 = vmatprep.subr.bf16.mxu0 %v131
  %724 = vmatpush1.bf16.msra.mxu0 %v130
  %725 = vmatprep.subr.bf16.mxu0 %v142
  %726 = vmatpush1.bf16.msra.mxu0 %v139
  %727 = vmatprep.subr.bf16.mxu0 0
  %728 = vmatpush1.bf16.msra.mxu0 0
  %729 = vmatprep.subr.bf16.mxu0 0
  %730 = vmatpush1.bf16.msra.mxu0 0
  %731 = vmatprep.subr.bf16.mxu0 0
  %732 = vmatpush1.bf16.msra.mxu0 0
  %733 = vmatprep.subr.bf16.mxu0 0
  %734 = vmatpush1.bf16.msra.mxu0 0
  %735 = vmatprep.subr.bf16.mxu0 0
  %736 = vmatpush1.bf16.msra.mxu0 0
  %737 = vmatprep.subr.bf16.mxu0 0
  %738 = vmatpush1.bf16.msra.mxu0 0
  %739 = vmatprep.subr.bf16.mxu0 0
  %740 = vmatpush1.bf16.msra.mxu0 0
  %741 = vmatprep.subr.bf16.mxu0 0
  %742 = vmatpush1.bf16.msra.mxu0 0
  %743 = vmatprep.subr.bf16.mxu0 0
  %744 = vmatpush1.bf16.msra.mxu0 0
  %745 = vmatprep.subr.bf16.mxu0 0
  %746 = vmatpush1.bf16.msra.mxu0 0
  %747 = vmatprep.subr.bf16.mxu0 0
  %748 = vmatpush1.bf16.msra.mxu0 0
  %749 = vmatprep.subr.bf16.mxu0 0
  %750 = vmatpush1.bf16.msra.mxu0 0
  %751 = vmatprep.subr.bf16.mxu0 0
  %752 = vmatpush1.bf16.msra.mxu0 0
  %753 = vmatprep.mubr.bf16.mxu0 0
  %754 = vmatmul.mubr.bf16.gmra.mrb[0].mxu0 %v678
  %v755 = vpop.f32.mrb[0].mxu0
  %v756 = vadd.f32 0.0, %v755
  %v757 = vpop.f32.mrb[0].mxu0
  %v758 = vadd.f32 0.0, %v757
  %v759 = vpop.f32.mrb[0].mxu0
  %v760 = vpop.f32.mrb[0].mxu0
  %761 = vdwg.mxu0
  %762 = vmatprep.subr.bf16.mxu0 %v201
  %763 = vmatpush1.bf16.msra.mxu0 %v200
  %764 = vmatprep.subr.bf16.mxu0 %v203
  %765 = vmatpush1.bf16.msra.mxu0 %v202
  %766 = vmatprep.subr.bf16.mxu0 %v214
  %767 = vmatpush1.bf16.msra.mxu0 %v211
  %768 = vmatprep.subr.bf16.mxu0 0
  %769 = vmatpush1.bf16.msra.mxu0 0
  %770 = vmatprep.subr.bf16.mxu0 0
  %771 = vmatpush1.bf16.msra.mxu0 0
  %772 = vmatprep.subr.bf16.mxu0 0
  %773 = vmatpush1.bf16.msra.mxu0 0
  %774 = vmatprep.subr.bf16.mxu0 0
  %775 = vmatpush1.bf16.msra.mxu0 0
  %776 = vmatprep.subr.bf16.mxu0 0
  %777 = vmatpush1.bf16.msra.mxu0 0
  %778 = vmatprep.subr.bf16.mxu0 0
  %779 = vmatpush1.bf16.msra.mxu0 0
  %780 = vmatprep.subr.bf16.mxu0 0
  %781 = vmatpush1.bf16.msra.mxu0 0
  %782 = vmatprep.subr.bf16.mxu0 0
  %783 = vmatpush1.bf16.msra.mxu0 0
  %784 = vmatprep.subr.bf16.mxu0 0
  %785 = vmatpush1.bf16.msra.mxu0 0
  %786 = vmatprep.subr.bf16.mxu0 0
  %787 = vmatpush1.bf16.msra.mxu0 0
  %788 = vmatprep.subr.bf16.mxu0 0
  %789 = vmatpush1.bf16.msra.mxu0 0
  %790 = vmatprep.subr.bf16.mxu0 0
  %791 = vmatpush1.bf16.msra.mxu0 0
  %792 = vmatprep.subr.bf16.mxu0 0
  %793 = vmatpush1.bf16.msra.mxu0 0
  %794 = vmatprep.mubr.bf16.mxu0 0
  %795 = vmatmul.mubr.bf16.gmra.mrb[0].mxu0 %v678
  %v796 = vpop.f32.mrb[0].mxu0
  %v797 = vadd.f32 0.0, %v796
  %v798 = vpop.f32.mrb[0].mxu0
  %v799 = vadd.f32 0.0, %v798
  %v800 = vpop.f32.mrb[0].mxu0
  %v801 = vpop.f32.mrb[0].mxu0
  %802 = vdwg.mxu0
  %803 = vmatprep.subr.bf16.mxu0 %v273
  %804 = vmatpush1.bf16.msra.mxu0 %v272
  %805 = vmatprep.subr.bf16.mxu0 %v275
  %806 = vmatpush1.bf16.msra.mxu0 %v274
  %807 = vmatprep.subr.bf16.mxu0 %v286
  %808 = vmatpush1.bf16.msra.mxu0 %v283
  %809 = vmatprep.subr.bf16.mxu0 0
  %810 = vmatpush1.bf16.msra.mxu0 0
  %811 = vmatprep.subr.bf16.mxu0 0
  %812 = vmatpush1.bf16.msra.mxu0 0
  %813 = vmatprep.subr.bf16.mxu0 0
  %814 = vmatpush1.bf16.msra.mxu0 0
  %815 = vmatprep.subr.bf16.mxu0 0
  %816 = vmatpush1.bf16.msra.mxu0 0
  %817 = vmatprep.subr.bf16.mxu0 0
  %818 = vmatpush1.bf16.msra.mxu0 0
  %819 = vmatprep.subr.bf16.mxu0 0
  %820 = vmatpush1.bf16.msra.mxu0 0
  %821 = vmatprep.subr.bf16.mxu0 0
  %822 = vmatpush1.bf16.msra.mxu0 0
  %823 = vmatprep.subr.bf16.mxu0 0
  %824 = vmatpush1.bf16.msra.mxu0 0
  %825 = vmatprep.subr.bf16.mxu0 0
  %826 = vmatpush1.bf16.msra.mxu0 0
  %827 = vmatprep.subr.bf16.mxu0 0
  %828 = vmatpush1.bf16.msra.mxu0 0
  %829 = vmatprep.subr.bf16.mxu0 0
  %830 = vmatpush1.bf16.msra.mxu0 0
  %831 = vmatprep.subr.bf16.mxu0 0
  %832 = vmatpush1.bf16.msra.mxu0 0
  %833 = vmatprep.subr.bf16.mxu0 0
  %834 = vmatpush1.bf16.msra.mxu0 0
  %835 = vmatprep.mubr.bf16.mxu0 0
  %836 = vmatmul.mubr.bf16.gmra.mrb[0].mxu0 %v678
  %v837 = vpop.f32.mrb[0].mxu0
  %v838 = vadd.f32 0.0, %v837
  %v839 = vpop.f32.mrb[0].mxu0
  %v840 = vadd.f32 0.0, %v839
  %v841 = vpop.f32.mrb[0].mxu0
  %v842 = vpop.f32.mrb[0].mxu0
  %843 = vdwg.mxu0
  %v844 = vmax.f32 %v546, %v715
  %v845 = vmax.f32 %v548, %v717
  %v846 = vmax.f32 %v587, %v756
  %v847 = vmax.f32 %v589, %v758
  %v848 = vmax.f32 %v628, %v797
  %v849 = vmax.f32 %v630, %v799
  %v850 = vmax.f32 %v669, %v838
  %v851 = vmax.f32 %v671, %v840
  %v852 = vmax.f32 %v498, %v844
  %v853 = vmax.f32 %v499, %v845
  %v854 = vmax.f32 %v500, %v846
  %v855 = vmax.f32 %v501, %v847
  %v856 = vmax.f32 %v502, %v848
  %v857 = vmax.f32 %v503, %v849
  %v858 = vmax.f32 %v504, %v850
  %v859 = vmax.f32 %v505, %v851
  %v860 = vld [vmem:[%s2] sm:$0x3f]
  %862 = vset.pattern.permute.xlu0 0
  %863 = vperm.xlu0 %862, %v860
  %v864 = vpop.permute.xlu0 %863
  %v866 = vadd.f32 %v852, %v864
  %v867 = vadd.f32 %v853, %v864
  %v868 = vadd.f32 %v854, %v864
  %v869 = vadd.f32 %v855, %v864
  %v870 = vadd.f32 %v856, %v864
  %v871 = vadd.f32 %v857, %v864
  %v872 = vadd.f32 %v858, %v864
  %v873 = vadd.f32 %v859, %v864
  %v874 = vmax.f32 %v866, 0.0
  %v875 = vmax.f32 %v867, 0.0
  %v876 = vmax.f32 %v868, 0.0
  %v877 = vmax.f32 %v869, 0.0
  %v878 = vmax.f32 %v870, 0.0
  %v879 = vmax.f32 %v871, 0.0
  %v880 = vmax.f32 %v872, 0.0
  %v881 = vmax.f32 %v873, 0.0
  %v882 = vpack.c.bf16 %v874, %v874
  %v883 = vpack.c.bf16 %v875, %v875
  %v884 = vpack.c.bf16 %v876, %v876
  %v885 = vpack.c.bf16 %v877, %v877
  %v886 = vpack.c.bf16 %v878, %v878
  %v887 = vpack.c.bf16 %v879, %v879
  %v888 = vpack.c.bf16 %v880, %v880
  %v889 = vpack.c.bf16 %v881, %v881
  %v898 = vunpack.c.l.b16 %v882
  %v899 = vunpack.c.l.b16 %v883
  %v900 = vunpack.c.l.b16 %v884
  %v901 = vunpack.c.l.b16 %v885
  %v902 = vunpack.c.l.b16 %v886
  %v903 = vunpack.c.l.b16 %v887
  %v904 = vunpack.c.l.b16 %v888
  %v905 = vunpack.c.l.b16 %v889
  %v906 = vpack.c.b16 %v899, %v898
  %v907 = vpack.c.b16 %v901, %v900
  %v908 = vpack.c.b16 %v903, %v902
  %v909 = vpack.c.b16 %v905, %v904
  %vm914 = vcmask 1042432
  %vm915 = vcmask 555012
  %vm916 = vmor %vm915, %vm914
  %917 = vst.msk [vmem:[%s3] sm:$0x77] %vm916, %v906
  %918 = vst.msk [vmem:[%s3 + $0x8] sm:$0x77] %vm916, %v907
  %919 = vst.msk [vmem:[%s3 + $0x10] sm:$0x77] %vm916, %v908
  %920 = vst.msk [vmem:[%s3 + $0x18] sm:$0x77] %vm916, %v909
  // Predicated region
  $region14: #{lenet5_forward.3} parent=0 // pred_check
    _
  $region15: #{lenet5_forward.3} parent=0 // pred_check_branch
    %922 = sbr.rel (0) target = $region17
  $region16: #{lenet5_forward.3} parent=0 // pred_region
    _
  $region17: #{lenet5_forward.3} parent=0 // pred_fallthru
    _
  // Predicated region
  $region18: #{lenet5_forward.3} parent=0 // pred_check
    _
  $region19: #{lenet5_forward.3} parent=0 // pred_check_branch
    %924 = sbr.rel (0) target = $region21
  $region20: #{lenet5_forward.3} parent=0 // pred_region
    _
  $region21: #{lenet5_forward.3} parent=0 // pred_fallthru
    _

// kernel: lenet5_forward.4
$region0: #{lenet5_forward.4}
  #allocation0 [shape = 'u32[]', space=smem, size = 0x4, offset = 0x4, fixed_abs, tag = 'smem constant byte address 0x4 - core index']
  #allocation1 [shape = 'u32[144,128]{1,0:T(1,128)}', space=vmem, size = 0x12000, scoped, tag = 'internal scratch']
  %s0 = inlined_call_operand.vmem [shape: bf16[4,216,25], index: 0, kind: input, shape index: {}]
  %s1 = inlined_call_operand.vmem [shape: bf16[4,16,216], index: 1, kind: input, shape index: {}]
  %s2 = inlined_call_operand.vmem [shape: f32[16,1], index: 2, kind: input, shape index: {}]
  %s3 = inlined_call_operand.vmem [shape: bf16[4,16,25], index: 3, kind: output, shape index: {}]
  %s4 = sld [smem:[#allocation0]]
  $region22: #{lenet5_forward.4} parent=0
    _
  %s6 = ssub.s32 1, %s4
  %s7 = scalar_select 0, %s6, %s4
  // Predicated region
  $region2: #{lenet5_forward.4} parent=0 // pred_check
    _
  $region3: #{lenet5_forward.4} parent=0 // pred_check_branch
    %9 = sbr.rel (0) target = $region5
  $region4: #{lenet5_forward.4} parent=0 // pred_region
    _
  $region5: #{lenet5_forward.4} parent=0 // pred_fallthru
    _
  // Predicated region
  $region6: #{lenet5_forward.4} parent=0 // pred_check
    _
  $region7: #{lenet5_forward.4} parent=0 // pred_check_branch
    %11 = sbr.rel (0) target = $region9
  $region8: #{lenet5_forward.4} parent=0 // pred_region
    _
  $region9: #{lenet5_forward.4} parent=0 // pred_fallthru
    _
  // Predicated region
  $region10: #{lenet5_forward.4} parent=0 // pred_check
    _
  $region11: #{lenet5_forward.4} parent=0 // pred_check_branch
    %13 = sbr.rel (0) target = $region13
  $region12: #{lenet5_forward.4} parent=0 // pred_region
    _
  $region13: #{lenet5_forward.4} parent=0 // pred_fallthru
    _
  %v15 = vld [vmem:[%s0] sm:$0xf]
  %v16 = vld [vmem:[%s0 + $0x4] sm:$0xf]
  %v17 = vld [vmem:[%s0 + $0x8] sm:$0xf]
  %v18 = vld [vmem:[%s0 + $0xc] sm:$0xf]
  %v19 = vld [vmem:[%s0 + $0x10] sm:$0xf]
  %v20 = vld [vmem:[%s0 + $0x14] sm:$0xf]
  %v21 = vld [vmem:[%s0 + $0x18] sm:$0xf]
  %v22 = vld [vmem:[%s0 + $0x1c] sm:$0xf]
  %v23 = vld [vmem:[%s0 + $0x20] sm:$0xf]
  %v24 = vld [vmem:[%s0 + $0x24] sm:$0xf]
  %v25 = vld [vmem:[%s0 + $0x28] sm:$0xf]
  %v26 = vld [vmem:[%s0 + $0x2c] sm:$0xf]
  %v27 = vld [vmem:[%s0 + $0x30] sm:$0xf]
  %v28 = vld [vmem:[%s0 + $0x34] sm:$0xf]
  %v29 = vld [vmem:[%s0 + $0x38] sm:$0xf]
  %v30 = vld [vmem:[%s0 + $0x3c] sm:$0xf]
  %v31 = vld [vmem:[%s0 + $0x40] sm:$0xf]
  %v32 = vld [vmem:[%s0 + $0x44] sm:$0xf]
  %v33 = vld [vmem:[%s0 + $0x48] sm:$0xf]
  %v34 = vld [vmem:[%s0 + $0x4c] sm:$0xf]
  %v35 = vld [vmem:[%s0 + $0x50] sm:$0xf]
  %v36 = vld [vmem:[%s0 + $0x54] sm:$0xf]
  %v37 = vld [vmem:[%s0 + $0x58] sm:$0xf]
  %v38 = vld [vmem:[%s0 + $0x5c] sm:$0xf]
  %v39 = vld [vmem:[%s0 + $0x60] sm:$0xf]
  %v40 = vld [vmem:[%s0 + $0x64] sm:$0xf]
  %v41 = vld [vmem:[%s0 + $0x68] sm:$0xf]
  %v42 = vld [vmem:[%s0 + $0x6c] sm:$0xf]
  %v43 = vld [vmem:[%s0 + $0x70] sm:$0xf]
  %v44 = vld [vmem:[%s0 + $0x74] sm:$0xf]
  %v45 = vld [vmem:[%s0 + $0x78] sm:$0xf]
  %v46 = vld [vmem:[%s0 + $0x7c] sm:$0xf]
  %v47 = vld [vmem:[%s0 + $0x80] sm:$0xf]
  %v48 = vld [vmem:[%s0 + $0x84] sm:$0xf]
  %v49 = vld [vmem:[%s0 + $0x88] sm:$0xf]
  %v50 = vld [vmem:[%s0 + $0x8c] sm:$0xf]
  %v51 = vld [vmem:[%s0 + $0x90] sm:$0xf]
  %v52 = vld [vmem:[%s0 + $0x94] sm:$0xf]
  %v53 = vld [vmem:[%s0 + $0x98] sm:$0xf]
  %v54 = vld [vmem:[%s0 + $0x9c] sm:$0xf]
  %v55 = vld [vmem:[%s0 + $0xa0] sm:$0xf]
  %v56 = vld [vmem:[%s0 + $0xa4] sm:$0xf]
  %v57 = vld [vmem:[%s0 + $0xa8] sm:$0xf]
  %v58 = vld [vmem:[%s0 + $0xac] sm:$0xf]
  %v59 = vld [vmem:[%s0 + $0xb0] sm:$0xf]
  %v60 = vld [vmem:[%s0 + $0xb4] sm:$0xf]
  %v61 = vld [vmem:[%s0 + $0xb8] sm:$0xf]
  %v62 = vld [vmem:[%s0 + $0xbc] sm:$0xf]
  %v63 = vld [vmem:[%s0 + $0xc0] sm:$0xf]
  %v64 = vld [vmem:[%s0 + $0xc4] sm:$0xf]
  %v65 = vld [vmem:[%s0 + $0xc8] sm:$0xf]
  %v66 = vld [vmem:[%s0 + $0xcc] sm:$0xf]
  %v67 = vld [vmem:[%s0 + $0xd0] sm:$0xf]
  %v68 = vld [vmem:[%s0 + $0xd4] sm:$0xf]
  %v69 = vld [vmem:[%s0 + $0xd8] sm:$0xf]
  %v70 = vld [vmem:[%s0 + $0xdc] sm:$0xf]
  %v71 = vld [vmem:[%s0 + $0xe0] sm:$0xf]
  %v72 = vld [vmem:[%s0 + $0xe4] sm:$0xf]
  %v73 = vld [vmem:[%s0 + $0xe8] sm:$0xf]
  %v74 = vld [vmem:[%s0 + $0xec] sm:$0xf]
  %v75 = vld [vmem:[%s0 + $0xf0] sm:$0xf]
  %v76 = vld [vmem:[%s0 + $0xf4] sm:$0xf]
  %v77 = vld [vmem:[%s0 + $0xf8] sm:$0xf]
  %v78 = vld [vmem:[%s0 + $0xfc] sm:$0xf]
  %v79 = vld [vmem:[%s0 + $0x100] sm:$0xf]
  %v80 = vld [vmem:[%s0 + $0x104] sm:$0xf]
  %v81 = vld [vmem:[%s0 + $0x108] sm:$0xf]
  %v82 = vld [vmem:[%s0 + $0x10c] sm:$0xf]
  %v83 = vld [vmem:[%s0 + $0x110] sm:$0xf]
  %v84 = vld [vmem:[%s0 + $0x114] sm:$0xf]
  %v85 = vld [vmem:[%s0 + $0x118] sm:$0xf]
  %v86 = vld [vmem:[%s0 + $0x11c] sm:$0xf]
  %v87 = vld [vmem:[%s0 + $0x120] sm:$0xf]
  %v88 = vld [vmem:[%s0 + $0x124] sm:$0xf]
  %v89 = vld [vmem:[%s0 + $0x128] sm:$0xf]
  %v90 = vld [vmem:[%s0 + $0x12c] sm:$0xf]
  %v91 = vld [vmem:[%s0 + $0x130] sm:$0xf]
  %v92 = vld [vmem:[%s0 + $0x134] sm:$0xf]
  %v93 = vld [vmem:[%s0 + $0x138] sm:$0xf]
  %v94 = vld [vmem:[%s0 + $0x13c] sm:$0xf]
  %v95 = vld [vmem:[%s0 + $0x140] sm:$0xf]
  %v96 = vld [vmem:[%s0 + $0x144] sm:$0xf]
  %v97 = vld [vmem:[%s0 + $0x148] sm:$0xf]
  %v98 = vld [vmem:[%s0 + $0x14c] sm:$0xf]
  %v99 = vld [vmem:[%s0 + $0x150] sm:$0xf]
  %v100 = vld [vmem:[%s0 + $0x154] sm:$0xf]
  %v101 = vld [vmem:[%s0 + $0x158] sm:$0xf]
  %v102 = vld [vmem:[%s0 + $0x15c] sm:$0xf]
  %v103 = vld [vmem:[%s0 + $0x160] sm:$0xf]
  %v104 = vld [vmem:[%s0 + $0x164] sm:$0xf]
  %v105 = vld [vmem:[%s0 + $0x168] sm:$0xf]
  %v106 = vld [vmem:[%s0 + $0x16c] sm:$0xf]
  %v107 = vld [vmem:[%s0 + $0x170] sm:$0xf]
  %v108 = vld [vmem:[%s0 + $0x174] sm:$0xf]
  %v109 = vld [vmem:[%s0 + $0x178] sm:$0xf]
  %v110 = vld [vmem:[%s0 + $0x17c] sm:$0xf]
  %v111 = vld [vmem:[%s0 + $0x180] sm:$0xf]
  %v112 = vld [vmem:[%s0 + $0x184] sm:$0xf]
  %v113 = vld [vmem:[%s0 + $0x188] sm:$0xf]
  %v114 = vld [vmem:[%s0 + $0x18c] sm:$0xf]
  %v115 = vld [vmem:[%s0 + $0x190] sm:$0xf]
  %v116 = vld [vmem:[%s0 + $0x194] sm:$0xf]
  %v117 = vld [vmem:[%s0 + $0x198] sm:$0xf]
  %v118 = vld [vmem:[%s0 + $0x19c] sm:$0xf]
  %v119 = vld [vmem:[%s0 + $0x1a0] sm:$0xf]
  %v120 = vld [vmem:[%s0 + $0x1a4] sm:$0xf]
  %v121 = vld [vmem:[%s0 + $0x1a8] sm:$0xf]
  %v122 = vld [vmem:[%s0 + $0x1ac] sm:$0xf]
  %v123 = vld [vmem:[%s1] sm:$0xff]
  %v124 = vld [vmem:[%s1 + $0x8] sm:$0xff]
  %v127 = vunpack.c.l.b16 %v123
  %v128 = vunpack.c.h.b16 %v123
  %v129 = vunpack.c.l.b16 %v124
  %v130 = vunpack.c.h.b16 %v124
  %v131 = vpack.c.b16 %v129, %v127
  %v132 = vpack.c.b16 %v130, %v128
  %v161 = vunpack.c.l.b16 %v15
  %v162 = vunpack.c.l.b16 %v16
  %v163 = vunpack.c.l.b16 %v17
  %v164 = vunpack.c.l.b16 %v18
  %v165 = vunpack.c.l.b16 %v19
  %v166 = vunpack.c.l.b16 %v20
  %v167 = vunpack.c.l.b16 %v21
  %v168 = vunpack.c.l.b16 %v22
  %v169 = vunpack.c.l.b16 %v23
  %v170 = vunpack.c.l.b16 %v24
  %v171 = vunpack.c.l.b16 %v25
  %v172 = vunpack.c.l.b16 %v26
  %v173 = vunpack.c.l.b16 %v27
  %v174 = vunpack.c.l.b16 %v28
  %v175 = vunpack.c.l.b16 %v29
  %v176 = vunpack.c.l.b16 %v30
  %v177 = vunpack.c.l.b16 %v31
  %v178 = vunpack.c.l.b16 %v32
  %v179 = vunpack.c.l.b16 %v33
  %v180 = vunpack.c.l.b16 %v34
  %v181 = vunpack.c.l.b16 %v35
  %v182 = vunpack.c.l.b16 %v36
  %v183 = vunpack.c.l.b16 %v37
  %v184 = vunpack.c.l.b16 %v38
  %v185 = vunpack.c.l.b16 %v39
  %v186 = vunpack.c.l.b16 %v40
  %v187 = vunpack.c.l.b16 %v41
  %v188 = vpack.c.b16 %v162, %v161
  %v189 = vpack.c.b16 %v164, %v163
  %v190 = vpack.c.b16 %v166, %v165
  %v191 = vpack.c.b16 %v168, %v167
  %v192 = vpack.c.b16 %v170, %v169
  %v193 = vpack.c.b16 %v172, %v171
  %v194 = vpack.c.b16 %v174, %v173
  %v195 = vpack.c.b16 %v176, %v175
  %v196 = vpack.c.b16 %v178, %v177
  %v197 = vpack.c.b16 %v180, %v179
  %v198 = vpack.c.b16 %v182, %v181
  %v199 = vpack.c.b16 %v184, %v183
  %v200 = vpack.c.b16 %v186, %v185
  %v201 = vpack.c.b16 %v187, %v187
  %vm215 = vcmask 719872
  %v217 = vsel %vm215, %v132, 0
  %vm219 = vcmask 1043456
  %v221 = vsel %vm219, %v201, 0
  %223 = vmatprep.subr.bf16.mxu0 0
  %224 = vmatpush1.bf16.msra.mxu0 %v188
  %225 = vmatprep.subr.bf16.mxu0 0
  %226 = vmatpush1.bf16.msra.mxu0 %v189
  %227 = vmatprep.subr.bf16.mxu0 0
  %228 = vmatpush1.bf16.msra.mxu0 %v190
  %229 = vmatprep.subr.bf16.mxu0 0
  %230 = vmatpush1.bf16.msra.mxu0 %v191
  %231 = vmatprep.subr.bf16.mxu0 0
  %232 = vmatpush1.bf16.msra.mxu0 %v192
  %233 = vmatprep.subr.bf16.mxu0 0
  %234 = vmatpush1.bf16.msra.mxu0 %v193
  %235 = vmatprep.subr.bf16.mxu0 0
  %236 = vmatpush1.bf16.msra.mxu0 %v194
  %237 = vmatprep.subr.bf16.mxu0 0
  %238 = vmatpush1.bf16.msra.mxu0 %v195
  %239 = vmatprep.subr.bf16.mxu0 0
  %240 = vmatpush1.bf16.msra.mxu0 %v196
  %241 = vmatprep.subr.bf16.mxu0 0
  %242 = vmatpush1.bf16.msra.mxu0 %v197
  %243 = vmatprep.subr.bf16.mxu0 0
  %244 = vmatpush1.bf16.msra.mxu0 %v198
  %245 = vmatprep.subr.bf16.mxu0 0
  %246 = vmatpush1.bf16.msra.mxu0 %v199
  %247 = vmatprep.subr.bf16.mxu0 0
  %248 = vmatpush1.bf16.msra.mxu0 %v200
  %249 = vmatprep.subr.bf16.mxu0 0
  %250 = vmatpush1.bf16.msra.mxu0 %v221
  %251 = vmatprep.subr.bf16.mxu0 0
  %252 = vmatpush1.bf16.msra.mxu0 0
  %253 = vmatprep.subr.bf16.mxu0 0
  %254 = vmatpush1.bf16.msra.mxu0 0
  %255 = vmatprep.mubr.bf16.mxu0 %v217
  %256 = vmatmul.mubr.bf16.gmra.mrb[0].mxu0 %v131
  %v257 = vpop.f32.mrb[0].mxu0
  %v258 = vadd.f32 0.0, %v257
  %v259 = vpop.f32.mrb[0].mxu0
  %v260 = vpop.f32.mrb[0].mxu0
  %v261 = vadd.f32 0.0, %v260
  %v262 = vpop.f32.mrb[0].mxu0
  %263 = vdwg.mxu0
  %v291 = vunpack.c.l.b16 %v42
  %v292 = vunpack.c.l.b16 %v43
  %v293 = vunpack.c.l.b16 %v44
  %v294 = vunpack.c.l.b16 %v45
  %v295 = vunpack.c.l.b16 %v46
  %v296 = vunpack.c.l.b16 %v47
  %v297 = vunpack.c.l.b16 %v48
  %v298 = vunpack.c.l.b16 %v49
  %v299 = vunpack.c.l.b16 %v50
  %v300 = vunpack.c.l.b16 %v51
  %v301 = vunpack.c.l.b16 %v52
  %v302 = vunpack.c.l.b16 %v53
  %v303 = vunpack.c.l.b16 %v54
  %v304 = vunpack.c.l.b16 %v55
  %v305 = vunpack.c.l.b16 %v56
  %v306 = vunpack.c.l.b16 %v57
  %v307 = vunpack.c.l.b16 %v58
  %v308 = vunpack.c.l.b16 %v59
  %v309 = vunpack.c.l.b16 %v60
  %v310 = vunpack.c.l.b16 %v61
  %v311 = vunpack.c.l.b16 %v62
  %v312 = vunpack.c.l.b16 %v63
  %v313 = vunpack.c.l.b16 %v64
  %v314 = vunpack.c.l.b16 %v65
  %v315 = vunpack.c.l.b16 %v66
  %v316 = vunpack.c.l.b16 %v67
  %v317 = vunpack.c.l.b16 %v68
  %v318 = vpack.c.b16 %v292, %v291
  %v319 = vpack.c.b16 %v294, %v293
  %v320 = vpack.c.b16 %v296, %v295
  %v321 = vpack.c.b16 %v298, %v297
  %v322 = vpack.c.b16 %v300, %v299
  %v323 = vpack.c.b16 %v302, %v301
  %v324 = vpack.c.b16 %v304, %v303
  %v325 = vpack.c.b16 %v306, %v305
  %v326 = vpack.c.b16 %v308, %v307
  %v327 = vpack.c.b16 %v310, %v309
  %v328 = vpack.c.b16 %v312, %v311
  %v329 = vpack.c.b16 %v314, %v313
  %v330 = vpack.c.b16 %v316, %v315
  %v331 = vpack.c.b16 %v317, %v317
  %v346 = vsel %vm219, %v331, 0
  %348 = vmatprep.subr.bf16.mxu0 0
  %349 = vmatpush1.bf16.msra.mxu0 %v318
  %350 = vmatprep.subr.bf16.mxu0 0
  %351 = vmatpush1.bf16.msra.mxu0 %v319
  %352 = vmatprep.subr.bf16.mxu0 0
  %353 = vmatpush1.bf16.msra.mxu0 %v320
  %354 = vmatprep.subr.bf16.mxu0 0
  %355 = vmatpush1.bf16.msra.mxu0 %v321
  %356 = vmatprep.subr.bf16.mxu0 0
  %357 = vmatpush1.bf16.msra.mxu0 %v322
  %358 = vmatprep.subr.bf16.mxu0 0
  %359 = vmatpush1.bf16.msra.mxu0 %v323
  %360 = vmatprep.subr.bf16.mxu0 0
  %361 = vmatpush1.bf16.msra.mxu0 %v324
  %362 = vmatprep.subr.bf16.mxu0 0
  %363 = vmatpush1.bf16.msra.mxu0 %v325
  %364 = vmatprep.subr.bf16.mxu0 0
  %365 = vmatpush1.bf16.msra.mxu0 %v326
  %366 = vmatprep.subr.bf16.mxu0 0
  %367 = vmatpush1.bf16.msra.mxu0 %v327
  %368 = vmatprep.subr.bf16.mxu0 0
  %369 = vmatpush1.bf16.msra.mxu0 %v328
  %370 = vmatprep.subr.bf16.mxu0 0
  %371 = vmatpush1.bf16.msra.mxu0 %v329
  %372 = vmatprep.subr.bf16.mxu0 0
  %373 = vmatpush1.bf16.msra.mxu0 %v330
  %374 = vmatprep.subr.bf16.mxu0 0
  %375 = vmatpush1.bf16.msra.mxu0 %v346
  %376 = vmatprep.subr.bf16.mxu0 0
  %377 = vmatpush1.bf16.msra.mxu0 0
  %378 = vmatprep.subr.bf16.mxu0 0
  %379 = vmatpush1.bf16.msra.mxu0 0
  %380 = vmatprep.mubr.bf16.mxu0 %v217
  %381 = vmatmul.mubr.bf16.gmra.mrb[0].mxu0 %v131
  %v382 = vpop.f32.mrb[0].mxu0
  %v383 = vadd.f32 0.0, %v382
  %v384 = vpop.f32.mrb[0].mxu0
  %v385 = vpop.f32.mrb[0].mxu0
  %v386 = vadd.f32 0.0, %v385
  %v387 = vpop.f32.mrb[0].mxu0
  %388 = vdwg.mxu0
  %v416 = vunpack.c.l.b16 %v69
  %v417 = vunpack.c.l.b16 %v70
  %v418 = vunpack.c.l.b16 %v71
  %v419 = vunpack.c.l.b16 %v72
  %v420 = vunpack.c.l.b16 %v73
  %v421 = vunpack.c.l.b16 %v74
  %v422 = vunpack.c.l.b16 %v75
  %v423 = vunpack.c.l.b16 %v76
  %v424 = vunpack.c.l.b16 %v77
  %v425 = vunpack.c.l.b16 %v78
  %v426 = vunpack.c.l.b16 %v79
  %v427 = vunpack.c.l.b16 %v80
  %v428 = vunpack.c.l.b16 %v81
  %v429 = vunpack.c.l.b16 %v82
  %v430 = vunpack.c.l.b16 %v83
  %v431 = vunpack.c.l.b16 %v84
  %v432 = vunpack.c.l.b16 %v85
  %v433 = vunpack.c.l.b16 %v86
  %v434 = vunpack.c.l.b16 %v87
  %v435 = vunpack.c.l.b16 %v88
  %v436 = vunpack.c.l.b16 %v89
  %v437 = vunpack.c.l.b16 %v90
  %v438 = vunpack.c.l.b16 %v91
  %v439 = vunpack.c.l.b16 %v92
  %v440 = vunpack.c.l.b16 %v93
  %v441 = vunpack.c.l.b16 %v94
  %v442 = vunpack.c.l.b16 %v95
  %v443 = vpack.c.b16 %v417, %v416
  %v444 = vpack.c.b16 %v419, %v418
  %v445 = vpack.c.b16 %v421, %v420
  %v446 = vpack.c.b16 %v423, %v422
  %v447 = vpack.c.b16 %v425, %v424
  %v448 = vpack.c.b16 %v427, %v426
  %v449 = vpack.c.b16 %v429, %v428
  %v450 = vpack.c.b16 %v431, %v430
  %v451 = vpack.c.b16 %v433, %v432
  %v452 = vpack.c.b16 %v435, %v434
  %v453 = vpack.c.b16 %v437, %v436
  %v454 = vpack.c.b16 %v439, %v438
  %v455 = vpack.c.b16 %v441, %v440
  %v456 = vpack.c.b16 %v442, %v442
  %v471 = vsel %vm219, %v456, 0
  %473 = vmatprep.subr.bf16.mxu0 0
  %474 = vmatpush1.bf16.msra.mxu0 %v443
  %475 = vmatprep.subr.bf16.mxu0 0
  %476 = vmatpush1.bf16.msra.mxu0 %v444
  %477 = vmatprep.subr.bf16.mxu0 0
  %478 = vmatpush1.bf16.msra.mxu0 %v445
  %479 = vmatprep.subr.bf16.mxu0 0
  %480 = vmatpush1.bf16.msra.mxu0 %v446
  %481 = vmatprep.subr.bf16.mxu0 0
  %482 = vmatpush1.bf16.msra.mxu0 %v447
  %483 = vmatprep.subr.bf16.mxu0 0
  %484 = vmatpush1.bf16.msra.mxu0 %v448
  %485 = vmatprep.subr.bf16.mxu0 0
  %486 = vmatpush1.bf16.msra.mxu0 %v449
  %487 = vmatprep.subr.bf16.mxu0 0
  %488 = vmatpush1.bf16.msra.mxu0 %v450
  %489 = vmatprep.subr.bf16.mxu0 0
  %490 = vmatpush1.bf16.msra.mxu0 %v451
  %491 = vmatprep.subr.bf16.mxu0 0
  %492 = vmatpush1.bf16.msra.mxu0 %v452
  %493 = vmatprep.subr.bf16.mxu0 0
  %494 = vmatpush1.bf16.msra.mxu0 %v453
  %495 = vmatprep.subr.bf16.mxu0 0
  %496 = vmatpush1.bf16.msra.mxu0 %v454
  %497 = vmatprep.subr.bf16.mxu0 0
  %498 = vmatpush1.bf16.msra.mxu0 %v455
  %499 = vmatprep.subr.bf16.mxu0 0
  %500 = vmatpush1.bf16.msra.mxu0 %v471
  %501 = vmatprep.subr.bf16.mxu0 0
  %502 = vmatpush1.bf16.msra.mxu0 0
  %503 = vmatprep.subr.bf16.mxu0 0
  %504 = vmatpush1.bf16.msra.mxu0 0
  %505 = vmatprep.mubr.bf16.mxu0 %v217
  %506 = vmatmul.mubr.bf16.gmra.mrb[0].mxu0 %v131
  %v507 = vpop.f32.mrb[0].mxu0
  %v508 = vadd.f32 0.0, %v507
  %v509 = vpop.f32.mrb[0].mxu0
  %v510 = vpop.f32.mrb[0].mxu0
  %v511 = vadd.f32 0.0, %v510
  %v512 = vpop.f32.mrb[0].mxu0
  %513 = vdwg.mxu0
  %v541 = vunpack.c.l.b16 %v96
  %v542 = vunpack.c.l.b16 %v97
  %v543 = vunpack.c.l.b16 %v98
  %v544 = vunpack.c.l.b16 %v99
  %v545 = vunpack.c.l.b16 %v100
  %v546 = vunpack.c.l.b16 %v101
  %v547 = vunpack.c.l.b16 %v102
  %v548 = vunpack.c.l.b16 %v103
  %v549 = vunpack.c.l.b16 %v104
  %v550 = vunpack.c.l.b16 %v105
  %v551 = vunpack.c.l.b16 %v106
  %v552 = vunpack.c.l.b16 %v107
  %v553 = vunpack.c.l.b16 %v108
  %v554 = vunpack.c.l.b16 %v109
  %v555 = vunpack.c.l.b16 %v110
  %v556 = vunpack.c.l.b16 %v111
  %v557 = vunpack.c.l.b16 %v112
  %v558 = vunpack.c.l.b16 %v113
  %v559 = vunpack.c.l.b16 %v114
  %v560 = vunpack.c.l.b16 %v115
  %v561 = vunpack.c.l.b16 %v116
  %v562 = vunpack.c.l.b16 %v117
  %v563 = vunpack.c.l.b16 %v118
  %v564 = vunpack.c.l.b16 %v119
  %v565 = vunpack.c.l.b16 %v120
  %v566 = vunpack.c.l.b16 %v121
  %v567 = vunpack.c.l.b16 %v122
  %v568 = vpack.c.b16 %v542, %v541
  %v569 = vpack.c.b16 %v544, %v543
  %v570 = vpack.c.b16 %v546, %v545
  %v571 = vpack.c.b16 %v548, %v547
  %v572 = vpack.c.b16 %v550, %v549
  %v573 = vpack.c.b16 %v552, %v551
  %v574 = vpack.c.b16 %v554, %v553
  %v575 = vpack.c.b16 %v556, %v555
  %v576 = vpack.c.b16 %v558, %v557
  %v577 = vpack.c.b16 %v560, %v559
  %v578 = vpack.c.b16 %v562, %v561
  %v579 = vpack.c.b16 %v564, %v563
  %v580 = vpack.c.b16 %v566, %v565
  %v581 = vpack.c.b16 %v567, %v567
  %v596 = vsel %vm219, %v581, 0
  %598 = vmatprep.subr.bf16.mxu0 0
  %599 = vmatpush1.bf16.msra.mxu0 %v568
  %600 = vmatprep.subr.bf16.mxu0 0
  %601 = vmatpush1.bf16.msra.mxu0 %v569
  %602 = vmatprep.subr.bf16.mxu0 0
  %603 = vmatpush1.bf16.msra.mxu0 %v570
  %604 = vmatprep.subr.bf16.mxu0 0
  %605 = vmatpush1.bf16.msra.mxu0 %v571
  %606 = vmatprep.subr.bf16.mxu0 0
  %607 = vmatpush1.bf16.msra.mxu0 %v572
  %608 = vmatprep.subr.bf16.mxu0 0
  %609 = vmatpush1.bf16.msra.mxu0 %v573
  %610 = vmatprep.subr.bf16.mxu0 0
  %611 = vmatpush1.bf16.msra.mxu0 %v574
  %612 = vmatprep.subr.bf16.mxu0 0
  %613 = vmatpush1.bf16.msra.mxu0 %v575
  %614 = vmatprep.subr.bf16.mxu0 0
  %615 = vmatpush1.bf16.msra.mxu0 %v576
  %616 = vmatprep.subr.bf16.mxu0 0
  %617 = vmatpush1.bf16.msra.mxu0 %v577
  %618 = vmatprep.subr.bf16.mxu0 0
  %619 = vmatpush1.bf16.msra.mxu0 %v578
  %620 = vmatprep.subr.bf16.mxu0 0
  %621 = vmatpush1.bf16.msra.mxu0 %v579
  %622 = vmatprep.subr.bf16.mxu0 0
  %623 = vmatpush1.bf16.msra.mxu0 %v580
  %624 = vmatprep.subr.bf16.mxu0 0
  %625 = vmatpush1.bf16.msra.mxu0 %v596
  %626 = vmatprep.subr.bf16.mxu0 0
  %627 = vmatpush1.bf16.msra.mxu0 0
  %628 = vmatprep.subr.bf16.mxu0 0
  %629 = vmatpush1.bf16.msra.mxu0 0
  %630 = vmatprep.mubr.bf16.mxu0 %v217
  %631 = vmatmul.mubr.bf16.gmra.mrb[0].mxu0 %v131
  %v632 = vpop.f32.mrb[0].mxu0
  %v633 = vadd.f32 0.0, %v632
  %v634 = vpop.f32.mrb[0].mxu0
  %v635 = vpop.f32.mrb[0].mxu0
  %v636 = vadd.f32 0.0, %v635
  %v637 = vpop.f32.mrb[0].mxu0
  %638 = vdwg.mxu0
  %s639 = scalar_lea.vmem %s1, 16
  %v640 = vld [vmem:[%s639] sm:$0xff]
  %v641 = vld [vmem:[%s639 + $0x8] sm:$0xff]
  %v644 = vunpack.c.l.b16 %v640
  %v645 = vunpack.c.h.b16 %v640
  %v646 = vunpack.c.l.b16 %v641
  %v647 = vunpack.c.h.b16 %v641
  %v648 = vpack.c.b16 %v646, %v644
  %v649 = vpack.c.b16 %v647, %v645
  %v652 = vsel %vm215, %v649, 0
  %654 = vmatprep.subr.bf16.mxu0 0
  %655 = vmatpush1.bf16.msra.mxu0 %v188
  %656 = vmatprep.subr.bf16.mxu0 0
  %657 = vmatpush1.bf16.msra.mxu0 %v189
  %658 = vmatprep.subr.bf16.mxu0 0
  %659 = vmatpush1.bf16.msra.mxu0 %v190
  %660 = vmatprep.subr.bf16.mxu0 0
  %661 = vmatpush1.bf16.msra.mxu0 %v191
  %662 = vmatprep.subr.bf16.mxu0 0
  %663 = vmatpush1.bf16.msra.mxu0 %v192
  %664 = vmatprep.subr.bf16.mxu0 0
  %665 = vmatpush1.bf16.msra.mxu0 %v193
  %666 = vmatprep.subr.bf16.mxu0 0
  %667 = vmatpush1.bf16.msra.mxu0 %v194
  %668 = vmatprep.subr.bf16.mxu0 0
  %669 = vmatpush1.bf16.msra.mxu0 %v195
  %670 = vmatprep.subr.bf16.mxu0 0
  %671 = vmatpush1.bf16.msra.mxu0 %v196
  %672 = vmatprep.subr.bf16.mxu0 0
  %673 = vmatpush1.bf16.msra.mxu0 %v197
  %674 = vmatprep.subr.bf16.mxu0 0
  %675 = vmatpush1.bf16.msra.mxu0 %v198
  %676 = vmatprep.subr.bf16.mxu0 0
  %677 = vmatpush1.bf16.msra.mxu0 %v199
  %678 = vmatprep.subr.bf16.mxu0 0
  %679 = vmatpush1.bf16.msra.mxu0 %v200
  %680 = vmatprep.subr.bf16.mxu0 0
  %681 = vmatpush1.bf16.msra.mxu0 %v221
  %682 = vmatprep.subr.bf16.mxu0 0
  %683 = vmatpush1.bf16.msra.mxu0 0
  %684 = vmatprep.subr.bf16.mxu0 0
  %685 = vmatpush1.bf16.msra.mxu0 0
  %686 = vmatprep.mubr.bf16.mxu0 %v652
  %687 = vmatmul.mubr.bf16.gmra.mrb[0].mxu0 %v648
  %v688 = vpop.f32.mrb[0].mxu0
  %v689 = vadd.f32 0.0, %v688
  %v690 = vpop.f32.mrb[0].mxu0
  %v691 = vpop.f32.mrb[0].mxu0
  %v692 = vadd.f32 0.0, %v691
  %v693 = vpop.f32.mrb[0].mxu0
  %694 = vdwg.mxu0
  %695 = vmatprep.subr.bf16.mxu0 0
  %696 = vmatpush1.bf16.msra.mxu0 %v318
  %697 = vmatprep.subr.bf16.mxu0 0
  %698 = vmatpush1.bf16.msra.mxu0 %v319
  %699 = vmatprep.subr.bf16.mxu0 0
  %700 = vmatpush1.bf16.msra.mxu0 %v320
  %701 = vmatprep.subr.bf16.mxu0 0
  %702 = vmatpush1.bf16.msra.mxu0 %v321
  %703 = vmatprep.subr.bf16.mxu0 0
  %704 = vmatpush1.bf16.msra.mxu0 %v322
  %705 = vmatprep.subr.bf16.mxu0 0
  %706 = vmatpush1.bf16.msra.mxu0 %v323
  %707 = vmatprep.subr.bf16.mxu0 0
  %708 = vmatpush1.bf16.msra.mxu0 %v324
  %709 = vmatprep.subr.bf16.mxu0 0
  %710 = vmatpush1.bf16.msra.mxu0 %v325
  %711 = vmatprep.subr.bf16.mxu0 0
  %712 = vmatpush1.bf16.msra.mxu0 %v326
  %713 = vmatprep.subr.bf16.mxu0 0
  %714 = vmatpush1.bf16.msra.mxu0 %v327
  %715 = vmatprep.subr.bf16.mxu0 0
  %716 = vmatpush1.bf16.msra.mxu0 %v328
  %717 = vmatprep.subr.bf16.mxu0 0
  %718 = vmatpush1.bf16.msra.mxu0 %v329
  %719 = vmatprep.subr.bf16.mxu0 0
  %720 = vmatpush1.bf16.msra.mxu0 %v330
  %721 = vmatprep.subr.bf16.mxu0 0
  %722 = vmatpush1.bf16.msra.mxu0 %v346
  %723 = vmatprep.subr.bf16.mxu0 0
  %724 = vmatpush1.bf16.msra.mxu0 0
  %725 = vmatprep.subr.bf16.mxu0 0
  %726 = vmatpush1.bf16.msra.mxu0 0
  %727 = vmatprep.mubr.bf16.mxu0 %v652
  %728 = vmatmul.mubr.bf16.gmra.mrb[0].mxu0 %v648
  %v729 = vpop.f32.mrb[0].mxu0
  %v730 = vadd.f32 0.0, %v729
  %v731 = vpop.f32.mrb[0].mxu0
  %v732 = vpop.f32.mrb[0].mxu0
  %v733 = vadd.f32 0.0, %v732
  %v734 = vpop.f32.mrb[0].mxu0
  %735 = vdwg.mxu0
  %736 = vmatprep.subr.bf16.mxu0 0
  %737 = vmatpush1.bf16.msra.mxu0 %v443
  %738 = vmatprep.subr.bf16.mxu0 0
  %739 = vmatpush1.bf16.msra.mxu0 %v444
  %740 = vmatprep.subr.bf16.mxu0 0
  %741 = vmatpush1.bf16.msra.mxu0 %v445
  %742 = vmatprep.subr.bf16.mxu0 0
  %743 = vmatpush1.bf16.msra.mxu0 %v446
  %744 = vmatprep.subr.bf16.mxu0 0
  %745 = vmatpush1.bf16.msra.mxu0 %v447
  %746 = vmatprep.subr.bf16.mxu0 0
  %747 = vmatpush1.bf16.msra.mxu0 %v448
  %748 = vmatprep.subr.bf16.mxu0 0
  %749 = vmatpush1.bf16.msra.mxu0 %v449
  %750 = vmatprep.subr.bf16.mxu0 0
  %751 = vmatpush1.bf16.msra.mxu0 %v450
  %752 = vmatprep.subr.bf16.mxu0 0
  %753 = vmatpush1.bf16.msra.mxu0 %v451
  %754 = vmatprep.subr.bf16.mxu0 0
  %755 = vmatpush1.bf16.msra.mxu0 %v452
  %756 = vmatprep.subr.bf16.mxu0 0
  %757 = vmatpush1.bf16.msra.mxu0 %v453
  %758 = vmatprep.subr.bf16.mxu0 0
  %759 = vmatpush1.bf16.msra.mxu0 %v454
  %760 = vmatprep.subr.bf16.mxu0 0
  %761 = vmatpush1.bf16.msra.mxu0 %v455
  %762 = vmatprep.subr.bf16.mxu0 0
  %763 = vmatpush1.bf16.msra.mxu0 %v471
  %764 = vmatprep.subr.bf16.mxu0 0
  %765 = vmatpush1.bf16.msra.mxu0 0
  %766 = vmatprep.subr.bf16.mxu0 0
  %767 = vmatpush1.bf16.msra.mxu0 0
  %768 = vmatprep.mubr.bf16.mxu0 %v652
  %769 = vmatmul.mubr.bf16.gmra.mrb[0].mxu0 %v648
  %v770 = vpop.f32.mrb[0].mxu0
  %v771 = vadd.f32 0.0, %v770
  %v772 = vpop.f32.mrb[0].mxu0
  %v773 = vpop.f32.mrb[0].mxu0
  %v774 = vadd.f32 0.0, %v773
  %v775 = vpop.f32.mrb[0].mxu0
  %776 = vdwg.mxu0
  %777 = vmatprep.subr.bf16.mxu0 0
  %778 = vmatpush1.bf16.msra.mxu0 %v568
  %779 = vmatprep.subr.bf16.mxu0 0
  %780 = vmatpush1.bf16.msra.mxu0 %v569
  %781 = vmatprep.subr.bf16.mxu0 0
  %782 = vmatpush1.bf16.msra.mxu0 %v570
  %783 = vmatprep.subr.bf16.mxu0 0
  %784 = vmatpush1.bf16.msra.mxu0 %v571
  %785 = vmatprep.subr.bf16.mxu0 0
  %786 = vmatpush1.bf16.msra.mxu0 %v572
  %787 = vmatprep.subr.bf16.mxu0 0
  %788 = vmatpush1.bf16.msra.mxu0 %v573
  %789 = vmatprep.subr.bf16.mxu0 0
  %790 = vmatpush1.bf16.msra.mxu0 %v574
  %791 = vmatprep.subr.bf16.mxu0 0
  %792 = vmatpush1.bf16.msra.mxu0 %v575
  %793 = vmatprep.subr.bf16.mxu0 0
  %794 = vmatpush1.bf16.msra.mxu0 %v576
  %795 = vmatprep.subr.bf16.mxu0 0
  %796 = vmatpush1.bf16.msra.mxu0 %v577
  %797 = vmatprep.subr.bf16.mxu0 0
  %798 = vmatpush1.bf16.msra.mxu0 %v578
  %799 = vmatprep.subr.bf16.mxu0 0
  %800 = vmatpush1.bf16.msra.mxu0 %v579
  %801 = vmatprep.subr.bf16.mxu0 0
  %802 = vmatpush1.bf16.msra.mxu0 %v580
  %803 = vmatprep.subr.bf16.mxu0 0
  %804 = vmatpush1.bf16.msra.mxu0 %v596
  %805 = vmatprep.subr.bf16.mxu0 0
  %806 = vmatpush1.bf16.msra.mxu0 0
  %807 = vmatprep.subr.bf16.mxu0 0
  %808 = vmatpush1.bf16.msra.mxu0 0
  %809 = vmatprep.mubr.bf16.mxu0 %v652
  %810 = vmatmul.mubr.bf16.gmra.mrb[0].mxu0 %v648
  %v811 = vpop.f32.mrb[0].mxu0
  %v812 = vadd.f32 0.0, %v811
  %v813 = vpop.f32.mrb[0].mxu0
  %v814 = vpop.f32.mrb[0].mxu0
  %v815 = vadd.f32 0.0, %v814
  %v816 = vpop.f32.mrb[0].mxu0
  %817 = vdwg.mxu0
  %v818 = vmax.f32 %v258, %v689
  %v819 = vmax.f32 %v261, %v692
  %v820 = vmax.f32 %v383, %v730
  %v821 = vmax.f32 %v386, %v733
  %v822 = vmax.f32 %v508, %v771
  %v823 = vmax.f32 %v511, %v774
  %v824 = vmax.f32 %v633, %v812
  %v825 = vmax.f32 %v636, %v815
  %s826 = scalar_lea.vmem %s1, 32
  %v827 = vld [vmem:[%s826] sm:$0xff]
  %v828 = vld [vmem:[%s826 + $0x8] sm:$0xff]
  %v831 = vunpack.c.l.b16 %v827
  %v832 = vunpack.c.h.b16 %v827
  %v833 = vunpack.c.l.b16 %v828
  %v834 = vunpack.c.h.b16 %v828
  %v835 = vpack.c.b16 %v833, %v831
  %v836 = vpack.c.b16 %v834, %v832
  %v839 = vsel %vm215, %v836, 0
  %841 = vmatprep.subr.bf16.mxu0 0
  %842 = vmatpush1.bf16.msra.mxu0 %v188
  %843 = vmatprep.subr.bf16.mxu0 0
  %844 = vmatpush1.bf16.msra.mxu0 %v189
  %845 = vmatprep.subr.bf16.mxu0 0
  %846 = vmatpush1.bf16.msra.mxu0 %v190
  %847 = vmatprep.subr.bf16.mxu0 0
  %848 = vmatpush1.bf16.msra.mxu0 %v191
  %849 = vmatprep.subr.bf16.mxu0 0
  %850 = vmatpush1.bf16.msra.mxu0 %v192
  %851 = vmatprep.subr.bf16.mxu0 0
  %852 = vmatpush1.bf16.msra.mxu0 %v193
  %853 = vmatprep.subr.bf16.mxu0 0
  %854 = vmatpush1.bf16.msra.mxu0 %v194
  %855 = vmatprep.subr.bf16.mxu0 0
  %856 = vmatpush1.bf16.msra.mxu0 %v195
  %857 = vmatprep.subr.bf16.mxu0 0
  %858 = vmatpush1.bf16.msra.mxu0 %v196
  %859 = vmatprep.subr.bf16.mxu0 0
  %860 = vmatpush1.bf16.msra.mxu0 %v197
  %861 = vmatprep.subr.bf16.mxu0 0
  %862 = vmatpush1.bf16.msra.mxu0 %v198
  %863 = vmatprep.subr.bf16.mxu0 0
  %864 = vmatpush1.bf16.msra.mxu0 %v199
  %865 = vmatprep.subr.bf16.mxu0 0
  %866 = vmatpush1.bf16.msra.mxu0 %v200
  %867 = vmatprep.subr.bf16.mxu0 0
  %868 = vmatpush1.bf16.msra.mxu0 %v221
  %869 = vmatprep.subr.bf16.mxu0 0
  %870 = vmatpush1.bf16.msra.mxu0 0
  %871 = vmatprep.subr.bf16.mxu0 0
  %872 = vmatpush1.bf16.msra.mxu0 0
  %873 = vmatprep.mubr.bf16.mxu0 %v839
  %874 = vmatmul.mubr.bf16.gmra.mrb[0].mxu0 %v835
  %v875 = vpop.f32.mrb[0].mxu0
  %v876 = vadd.f32 0.0, %v875
  %v877 = vpop.f32.mrb[0].mxu0
  %v878 = vpop.f32.mrb[0].mxu0
  %v879 = vadd.f32 0.0, %v878
  %v880 = vpop.f32.mrb[0].mxu0
  %881 = vdwg.mxu0
  %882 = vmatprep.subr.bf16.mxu0 0
  %883 = vmatpush1.bf16.msra.mxu0 %v318
  %884 = vmatprep.subr.bf16.mxu0 0
  %885 = vmatpush1.bf16.msra.mxu0 %v319
  %886 = vmatprep.subr.bf16.mxu0 0
  %887 = vmatpush1.bf16.msra.mxu0 %v320
  %888 = vmatprep.subr.bf16.mxu0 0
  %889 = vmatpush1.bf16.msra.mxu0 %v321
  %890 = vmatprep.subr.bf16.mxu0 0
  %891 = vmatpush1.bf16.msra.mxu0 %v322
  %892 = vmatprep.subr.bf16.mxu0 0
  %893 = vmatpush1.bf16.msra.mxu0 %v323
  %894 = vmatprep.subr.bf16.mxu0 0
  %895 = vmatpush1.bf16.msra.mxu0 %v324
  %896 = vmatprep.subr.bf16.mxu0 0
  %897 = vmatpush1.bf16.msra.mxu0 %v325
  %898 = vmatprep.subr.bf16.mxu0 0
  %899 = vmatpush1.bf16.msra.mxu0 %v326
  %900 = vmatprep.subr.bf16.mxu0 0
  %901 = vmatpush1.bf16.msra.mxu0 %v327
  %902 = vmatprep.subr.bf16.mxu0 0
  %903 = vmatpush1.bf16.msra.mxu0 %v328
  %904 = vmatprep.subr.bf16.mxu0 0
  %905 = vmatpush1.bf16.msra.mxu0 %v329
  %906 = vmatprep.subr.bf16.mxu0 0
  %907 = vmatpush1.bf16.msra.mxu0 %v330
  %908 = vmatprep.subr.bf16.mxu0 0
  %909 = vmatpush1.bf16.msra.mxu0 %v346
  %910 = vmatprep.subr.bf16.mxu0 0
  %911 = vmatpush1.bf16.msra.mxu0 0
  %912 = vmatprep.subr.bf16.mxu0 0
  %913 = vmatpush1.bf16.msra.mxu0 0
  %914 = vmatprep.mubr.bf16.mxu0 %v839
  %915 = vmatmul.mubr.bf16.gmra.mrb[0].mxu0 %v835
  %v916 = vpop.f32.mrb[0].mxu0
  %v917 = vadd.f32 0.0, %v916
  %v918 = vpop.f32.mrb[0].mxu0
  %v919 = vpop.f32.mrb[0].mxu0
  %v920 = vadd.f32 0.0, %v919
  %v921 = vpop.f32.mrb[0].mxu0
  %922 = vdwg.mxu0
  %923 = vmatprep.subr.bf16.mxu0 0
  %924 = vmatpush1.bf16.msra.mxu0 %v443
  %925 = vmatprep.subr.bf16.mxu0 0
  %926 = vmatpush1.bf16.msra.mxu0 %v444
  %927 = vmatprep.subr.bf16.mxu0 0
  %928 = vmatpush1.bf16.msra.mxu0 %v445
  %929 = vmatprep.subr.bf16.mxu0 0
  %930 = vmatpush1.bf16.msra.mxu0 %v446
  %931 = vmatprep.subr.bf16.mxu0 0
  %932 = vmatpush1.bf16.msra.mxu0 %v447
  %933 = vmatprep.subr.bf16.mxu0 0
  %934 = vmatpush1.bf16.msra.mxu0 %v448
  %935 = vmatprep.subr.bf16.mxu0 0
  %936 = vmatpush1.bf16.msra.mxu0 %v449
  %937 = vmatprep.subr.bf16.mxu0 0
  %938 = vmatpush1.bf16.msra.mxu0 %v450
  %939 = vmatprep.subr.bf16.mxu0 0
  %940 = vmatpush1.bf16.msra.mxu0 %v451
  %941 = vmatprep.subr.bf16.mxu0 0
  %942 = vmatpush1.bf16.msra.mxu0 %v452
  %943 = vmatprep.subr.bf16.mxu0 0
  %944 = vmatpush1.bf16.msra.mxu0 %v453
  %945 = vmatprep.subr.bf16.mxu0 0
  %946 = vmatpush1.bf16.msra.mxu0 %v454
  %947 = vmatprep.subr.bf16.mxu0 0
  %948 = vmatpush1.bf16.msra.mxu0 %v455
  %949 = vmatprep.subr.bf16.mxu0 0
  %950 = vmatpush1.bf16.msra.mxu0 %v471
  %951 = vmatprep.subr.bf16.mxu0 0
  %952 = vmatpush1.bf16.msra.mxu0 0
  %953 = vmatprep.subr.bf16.mxu0 0
  %954 = vmatpush1.bf16.msra.mxu0 0
  %955 = vmatprep.mubr.bf16.mxu0 %v839
  %956 = vmatmul.mubr.bf16.gmra.mrb[0].mxu0 %v835
  %v957 = vpop.f32.mrb[0].mxu0
  %v958 = vadd.f32 0.0, %v957
  %v959 = vpop.f32.mrb[0].mxu0
  %v960 = vpop.f32.mrb[0].mxu0
  %v961 = vadd.f32 0.0, %v960
  %v962 = vpop.f32.mrb[0].mxu0
  %963 = vdwg.mxu0
  %964 = vmatprep.subr.bf16.mxu0 0
  %965 = vmatpush1.bf16.msra.mxu0 %v568
  %966 = vmatprep.subr.bf16.mxu0 0
  %967 = vmatpush1.bf16.msra.mxu0 %v569
  %968 = vmatprep.subr.bf16.mxu0 0
  %969 = vmatpush1.bf16.msra.mxu0 %v570
  %970 = vmatprep.subr.bf16.mxu0 0
  %971 = vmatpush1.bf16.msra.mxu0 %v571
  %972 = vmatprep.subr.bf16.mxu0 0
  %973 = vmatpush1.bf16.msra.mxu0 %v572
  %974 = vmatprep.subr.bf16.mxu0 0
  %975 = vmatpush1.bf16.msra.mxu0 %v573
  %976 = vmatprep.subr.bf16.mxu0 0
  %977 = vmatpush1.bf16.msra.mxu0 %v574
  %978 = vmatprep.subr.bf16.mxu0 0
  %979 = vmatpush1.bf16.msra.mxu0 %v575
  %980 = vmatprep.subr.bf16.mxu0 0
  %981 = vmatpush1.bf16.msra.mxu0 %v576
  %982 = vmatprep.subr.bf16.mxu0 0
  %983 = vmatpush1.bf16.msra.mxu0 %v577
  %984 = vmatprep.subr.bf16.mxu0 0
  %985 = vmatpush1.bf16.msra.mxu0 %v578
  %986 = vmatprep.subr.bf16.mxu0 0
  %987 = vmatpush1.bf16.msra.mxu0 %v579
  %988 = vmatprep.subr.bf16.mxu0 0
  %989 = vmatpush1.bf16.msra.mxu0 %v580
  %990 = vmatprep.subr.bf16.mxu0 0
  %991 = vmatpush1.bf16.msra.mxu0 %v596
  %992 = vmatprep.subr.bf16.mxu0 0
  %993 = vmatpush1.bf16.msra.mxu0 0
  %994 = vmatprep.subr.bf16.mxu0 0
  %995 = vmatpush1.bf16.msra.mxu0 0
  %996 = vmatprep.mubr.bf16.mxu0 %v839
  %997 = vmatmul.mubr.bf16.gmra.mrb[0].mxu0 %v835
  %v998 = vpop.f32.mrb[0].mxu0
  %v999 = vadd.f32 0.0, %v998
  %v1000 = vpop.f32.mrb[0].mxu0
  %v1001 = vpop.f32.mrb[0].mxu0
  %v1002 = vadd.f32 0.0, %v1001
  %v1003 = vpop.f32.mrb[0].mxu0
  %1004 = vdwg.mxu0
  %s1005 = scalar_lea.vmem %s1, 48
  %v1006 = vld [vmem:[%s1005] sm:$0xff]
  %v1007 = vld [vmem:[%s1005 + $0x8] sm:$0xff]
  %v1010 = vunpack.c.l.b16 %v1006
  %v1011 = vunpack.c.h.b16 %v1006
  %v1012 = vunpack.c.l.b16 %v1007
  %v1013 = vunpack.c.h.b16 %v1007
  %v1014 = vpack.c.b16 %v1012, %v1010
  %v1015 = vpack.c.b16 %v1013, %v1011
  %v1018 = vsel %vm215, %v1015, 0
  %1020 = vmatprep.subr.bf16.mxu0 0
  %1021 = vmatpush1.bf16.msra.mxu0 %v188
  %1022 = vmatprep.subr.bf16.mxu0 0
  %1023 = vmatpush1.bf16.msra.mxu0 %v189
  %1024 = vmatprep.subr.bf16.mxu0 0
  %1025 = vmatpush1.bf16.msra.mxu0 %v190
  %1026 = vmatprep.subr.bf16.mxu0 0
  %1027 = vmatpush1.bf16.msra.mxu0 %v191
  %1028 = vmatprep.subr.bf16.mxu0 0
  %1029 = vmatpush1.bf16.msra.mxu0 %v192
  %1030 = vmatprep.subr.bf16.mxu0 0
  %1031 = vmatpush1.bf16.msra.mxu0 %v193
  %1032 = vmatprep.subr.bf16.mxu0 0
  %1033 = vmatpush1.bf16.msra.mxu0 %v194
  %1034 = vmatprep.subr.bf16.mxu0 0
  %1035 = vmatpush1.bf16.msra.mxu0 %v195
  %1036 = vmatprep.subr.bf16.mxu0 0
  %1037 = vmatpush1.bf16.msra.mxu0 %v196
  %1038 = vmatprep.subr.bf16.mxu0 0
  %1039 = vmatpush1.bf16.msra.mxu0 %v197
  %1040 = vmatprep.subr.bf16.mxu0 0
  %1041 = vmatpush1.bf16.msra.mxu0 %v198
  %1042 = vmatprep.subr.bf16.mxu0 0
  %1043 = vmatpush1.bf16.msra.mxu0 %v199
  %1044 = vmatprep.subr.bf16.mxu0 0
  %1045 = vmatpush1.bf16.msra.mxu0 %v200
  %1046 = vmatprep.subr.bf16.mxu0 0
  %1047 = vmatpush1.bf16.msra.mxu0 %v221
  %1048 = vmatprep.subr.bf16.mxu0 0
  %1049 = vmatpush1.bf16.msra.mxu0 0
  %1050 = vmatprep.subr.bf16.mxu0 0
  %1051 = vmatpush1.bf16.msra.mxu0 0
  %1052 = vmatprep.mubr.bf16.mxu0 %v1018
  %1053 = vmatmul.mubr.bf16.gmra.mrb[0].mxu0 %v1014
  %v1054 = vpop.f32.mrb[0].mxu0
  %v1055 = vadd.f32 0.0, %v1054
  %v1056 = vpop.f32.mrb[0].mxu0
  %v1057 = vpop.f32.mrb[0].mxu0
  %v1058 = vadd.f32 0.0, %v1057
  %v1059 = vpop.f32.mrb[0].mxu0
  %1060 = vdwg.mxu0
  %1061 = vmatprep.subr.bf16.mxu0 0
  %1062 = vmatpush1.bf16.msra.mxu0 %v318
  %1063 = vmatprep.subr.bf16.mxu0 0
  %1064 = vmatpush1.bf16.msra.mxu0 %v319
  %1065 = vmatprep.subr.bf16.mxu0 0
  %1066 = vmatpush1.bf16.msra.mxu0 %v320
  %1067 = vmatprep.subr.bf16.mxu0 0
  %1068 = vmatpush1.bf16.msra.mxu0 %v321
  %1069 = vmatprep.subr.bf16.mxu0 0
  %1070 = vmatpush1.bf16.msra.mxu0 %v322
  %1071 = vmatprep.subr.bf16.mxu0 0
  %1072 = vmatpush1.bf16.msra.mxu0 %v323
  %1073 = vmatprep.subr.bf16.mxu0 0
  %1074 = vmatpush1.bf16.msra.mxu0 %v324
  %1075 = vmatprep.subr.bf16.mxu0 0
  %1076 = vmatpush1.bf16.msra.mxu0 %v325
  %1077 = vmatprep.subr.bf16.mxu0 0
  %1078 = vmatpush1.bf16.msra.mxu0 %v326
  %1079 = vmatprep.subr.bf16.mxu0 0
  %1080 = vmatpush1.bf16.msra.mxu0 %v327
  %1081 = vmatprep.subr.bf16.mxu0 0
  %1082 = vmatpush1.bf16.msra.mxu0 %v328
  %1083 = vmatprep.subr.bf16.mxu0 0
  %1084 = vmatpush1.bf16.msra.mxu0 %v329
  %1085 = vmatprep.subr.bf16.mxu0 0
  %1086 = vmatpush1.bf16.msra.mxu0 %v330
  %1087 = vmatprep.subr.bf16.mxu0 0
  %1088 = vmatpush1.bf16.msra.mxu0 %v346
  %1089 = vmatprep.subr.bf16.mxu0 0
  %1090 = vmatpush1.bf16.msra.mxu0 0
  %1091 = vmatprep.subr.bf16.mxu0 0
  %1092 = vmatpush1.bf16.msra.mxu0 0
  %1093 = vmatprep.mubr.bf16.mxu0 %v1018
  %1094 = vmatmul.mubr.bf16.gmra.mrb[0].mxu0 %v1014
  %v1095 = vpop.f32.mrb[0].mxu0
  %v1096 = vadd.f32 0.0, %v1095
  %v1097 = vpop.f32.mrb[0].mxu0
  %v1098 = vpop.f32.mrb[0].mxu0
  %v1099 = vadd.f32 0.0, %v1098
  %v1100 = vpop.f32.mrb[0].mxu0
  %1101 = vdwg.mxu0
  %1102 = vmatprep.subr.bf16.mxu0 0
  %1103 = vmatpush1.bf16.msra.mxu0 %v443
  %1104 = vmatprep.subr.bf16.mxu0 0
  %1105 = vmatpush1.bf16.msra.mxu0 %v444
  %1106 = vmatprep.subr.bf16.mxu0 0
  %1107 = vmatpush1.bf16.msra.mxu0 %v445
  %1108 = vmatprep.subr.bf16.mxu0 0
  %1109 = vmatpush1.bf16.msra.mxu0 %v446
  %1110 = vmatprep.subr.bf16.mxu0 0
  %1111 = vmatpush1.bf16.msra.mxu0 %v447
  %1112 = vmatprep.subr.bf16.mxu0 0
  %1113 = vmatpush1.bf16.msra.mxu0 %v448
  %1114 = vmatprep.subr.bf16.mxu0 0
  %1115 = vmatpush1.bf16.msra.mxu0 %v449
  %1116 = vmatprep.subr.bf16.mxu0 0
  %1117 = vmatpush1.bf16.msra.mxu0 %v450
  %1118 = vmatprep.subr.bf16.mxu0 0
  %1119 = vmatpush1.bf16.msra.mxu0 %v451
  %1120 = vmatprep.subr.bf16.mxu0 0
  %1121 = vmatpush1.bf16.msra.mxu0 %v452
  %1122 = vmatprep.subr.bf16.mxu0 0
  %1123 = vmatpush1.bf16.msra.mxu0 %v453
  %1124 = vmatprep.subr.bf16.mxu0 0
  %1125 = vmatpush1.bf16.msra.mxu0 %v454
  %1126 = vmatprep.subr.bf16.mxu0 0
  %1127 = vmatpush1.bf16.msra.mxu0 %v455
  %1128 = vmatprep.subr.bf16.mxu0 0
  %1129 = vmatpush1.bf16.msra.mxu0 %v471
  %1130 = vmatprep.subr.bf16.mxu0 0
  %1131 = vmatpush1.bf16.msra.mxu0 0
  %1132 = vmatprep.subr.bf16.mxu0 0
  %1133 = vmatpush1.bf16.msra.mxu0 0
  %1134 = vmatprep.mubr.bf16.mxu0 %v1018
  %1135 = vmatmul.mubr.bf16.gmra.mrb[0].mxu0 %v1014
  %v1136 = vpop.f32.mrb[0].mxu0
  %v1137 = vadd.f32 0.0, %v1136
  %v1138 = vpop.f32.mrb[0].mxu0
  %v1139 = vpop.f32.mrb[0].mxu0
  %v1140 = vadd.f32 0.0, %v1139
  %v1141 = vpop.f32.mrb[0].mxu0
  %1142 = vdwg.mxu0
  %1143 = vmatprep.subr.bf16.mxu0 0
  %1144 = vmatpush1.bf16.msra.mxu0 %v568
  %1145 = vmatprep.subr.bf16.mxu0 0
  %1146 = vmatpush1.bf16.msra.mxu0 %v569
  %1147 = vmatprep.subr.bf16.mxu0 0
  %1148 = vmatpush1.bf16.msra.mxu0 %v570
  %1149 = vmatprep.subr.bf16.mxu0 0
  %1150 = vmatpush1.bf16.msra.mxu0 %v571
  %1151 = vmatprep.subr.bf16.mxu0 0
  %1152 = vmatpush1.bf16.msra.mxu0 %v572
  %1153 = vmatprep.subr.bf16.mxu0 0
  %1154 = vmatpush1.bf16.msra.mxu0 %v573
  %1155 = vmatprep.subr.bf16.mxu0 0
  %1156 = vmatpush1.bf16.msra.mxu0 %v574
  %1157 = vmatprep.subr.bf16.mxu0 0
  %1158 = vmatpush1.bf16.msra.mxu0 %v575
  %1159 = vmatprep.subr.bf16.mxu0 0
  %1160 = vmatpush1.bf16.msra.mxu0 %v576
  %1161 = vmatprep.subr.bf16.mxu0 0
  %1162 = vmatpush1.bf16.msra.mxu0 %v577
  %1163 = vmatprep.subr.bf16.mxu0 0
  %1164 = vmatpush1.bf16.msra.mxu0 %v578
  %1165 = vmatprep.subr.bf16.mxu0 0
  %1166 = vmatpush1.bf16.msra.mxu0 %v579
  %1167 = vmatprep.subr.bf16.mxu0 0
  %1168 = vmatpush1.bf16.msra.mxu0 %v580
  %1169 = vmatprep.subr.bf16.mxu0 0
  %1170 = vmatpush1.bf16.msra.mxu0 %v596
  %1171 = vmatprep.subr.bf16.mxu0 0
  %1172 = vmatpush1.bf16.msra.mxu0 0
  %1173 = vmatprep.subr.bf16.mxu0 0
  %1174 = vmatpush1.bf16.msra.mxu0 0
  %1175 = vmatprep.mubr.bf16.mxu0 %v1018
  %1176 = vmatmul.mubr.bf16.gmra.mrb[0].mxu0 %v1014
  %v1177 = vpop.f32.mrb[0].mxu0
  %v1178 = vadd.f32 0.0, %v1177
  %v1179 = vpop.f32.mrb[0].mxu0
  %v1180 = vpop.f32.mrb[0].mxu0
  %v1181 = vadd.f32 0.0, %v1180
  %v1182 = vpop.f32.mrb[0].mxu0
  %1183 = vdwg.mxu0
  %v1184 = vmax.f32 %v876, %v1055
  %v1185 = vmax.f32 %v879, %v1058
  %v1186 = vmax.f32 %v917, %v1096
  %v1187 = vmax.f32 %v920, %v1099
  %v1188 = vmax.f32 %v958, %v1137
  %v1189 = vmax.f32 %v961, %v1140
  %v1190 = vmax.f32 %v999, %v1178
  %v1191 = vmax.f32 %v1002, %v1181
  %v1192 = vmax.f32 %v818, %v1184
  %v1193 = vmax.f32 %v819, %v1185
  %v1194 = vmax.f32 %v820, %v1186
  %v1195 = vmax.f32 %v821, %v1187
  %v1196 = vmax.f32 %v822, %v1188
  %v1197 = vmax.f32 %v823, %v1189
  %v1198 = vmax.f32 %v824, %v1190
  %v1199 = vmax.f32 %v825, %v1191
  %v1200 = vld [vmem:[%s2] sm:$0xff]
  %v1201 = vld [vmem:[%s2 + $0x8] sm:$0xff]
  %1203 = vset.pattern.permute.xlu0 0
  %1204 = vperm.xlu0 %1203, %v1200
  %v1205 = vpop.permute.xlu0 %1204
  %1208 = vset.pattern.permute.xlu0 0
  %1209 = vperm.xlu0 %1208, %v1201
  %v1210 = vpop.permute.xlu0 %1209
  %v1212 = vadd.f32 %v1192, %v1205
  %v1213 = vadd.f32 %v1193, %v1210
  %v1214 = vadd.f32 %v1194, %v1205
  %v1215 = vadd.f32 %v1195, %v1210
  %v1216 = vadd.f32 %v1196, %v1205
  %v1217 = vadd.f32 %v1197, %v1210
  %v1218 = vadd.f32 %v1198, %v1205
  %v1219 = vadd.f32 %v1199, %v1210
  %v1220 = vmax.f32 %v1212, 0.0
  %v1221 = vmax.f32 %v1213, 0.0
  %v1222 = vmax.f32 %v1214, 0.0
  %v1223 = vmax.f32 %v1215, 0.0
  %v1224 = vmax.f32 %v1216, 0.0
  %v1225 = vmax.f32 %v1217, 0.0
  %v1226 = vmax.f32 %v1218, 0.0
  %v1227 = vmax.f32 %v1219, 0.0
  %v1228 = vpack.c.bf16 %v1221, %v1220
  %v1229 = vpack.c.bf16 %v1223, %v1222
  %v1230 = vpack.c.bf16 %v1225, %v1224
  %v1231 = vpack.c.bf16 %v1227, %v1226
  %v1236 = vunpack.c.l.b16 %v1228
  %v1237 = vunpack.c.h.b16 %v1228
  %v1238 = vunpack.c.l.b16 %v1229
  %v1239 = vunpack.c.h.b16 %v1229
  %v1240 = vunpack.c.l.b16 %v1230
  %v1241 = vunpack.c.h.b16 %v1230
  %v1242 = vunpack.c.l.b16 %v1231
  %v1243 = vunpack.c.h.b16 %v1231
  %v1244 = vpack.c.b16 %v1236, %v1236
  %v1245 = vpack.c.b16 %v1237, %v1237
  %v1246 = vpack.c.b16 %v1238, %v1238
  %v1247 = vpack.c.b16 %v1239, %v1239
  %v1248 = vpack.c.b16 %v1240, %v1240
  %v1249 = vpack.c.b16 %v1241, %v1241
  %v1250 = vpack.c.b16 %v1242, %v1242
  %v1251 = vpack.c.b16 %v1243, %v1243
  %vm1260 = vcmask 199680
  %1261 = vst.msk [vmem:[%s3] sm:$0xf] %vm1260, %v1244
  %1262 = vst.msk [vmem:[%s3 + $0x4] sm:$0xf] %vm1260, %v1245
  %1263 = vst.msk [vmem:[%s3 + $0x8] sm:$0xf] %vm1260, %v1246
  %1264 = vst.msk [vmem:[%s3 + $0xc] sm:$0xf] %vm1260, %v1247
  %1265 = vst.msk [vmem:[%s3 + $0x10] sm:$0xf] %vm1260, %v1248
  %1266 = vst.msk [vmem:[%s3 + $0x14] sm:$0xf] %vm1260, %v1249
  %1267 = vst.msk [vmem:[%s3 + $0x18] sm:$0xf] %vm1260, %v1250
  %1268 = vst.msk [vmem:[%s3 + $0x1c] sm:$0xf] %vm1260, %v1251
  // Predicated region
  $region14: #{lenet5_forward.4} parent=0 // pred_check
    _
  $region15: #{lenet5_forward.4} parent=0 // pred_check_branch
    %1270 = sbr.rel (0) target = $region17
  $region16: #{lenet5_forward.4} parent=0 // pred_region
    _
  $region17: #{lenet5_forward.4} parent=0 // pred_fallthru
    _
  // Predicated region
  $region18: #{lenet5_forward.4} parent=0 // pred_check
    _
  $region19: #{lenet5_forward.4} parent=0 // pred_check_branch
    %1272 = sbr.rel (0) target = $region21
  $region20: #{lenet5_forward.4} parent=0 // pred_region
    _
  $region21: #{lenet5_forward.4} parent=0 // pred_fallthru
    _

// kernel: lenet5_forward.5
$region0: #{lenet5_forward.5}
  #allocation0 [shape = 'u32[]', space=smem, size = 0x4, offset = 0x4, fixed_abs, tag = 'smem constant byte address 0x4 - core index']
  #allocation1 [shape = 'u32[144,128]{1,0:T(1,128)}', space=vmem, size = 0x12000, scoped, tag = 'internal scratch']
  %s0 = inlined_call_operand.vmem [shape: bf16[4,400], index: 0, kind: input, shape index: {}]
  %s1 = inlined_call_operand.vmem [shape: bf16[400,120], index: 1, kind: input, shape index: {}]
  %s2 = inlined_call_operand.vmem [shape: f32[1,120], index: 2, kind: input, shape index: {}]
  %s3 = inlined_call_operand.vmem [shape: bf16[120,84], index: 3, kind: input, shape index: {}]
  %s4 = inlined_call_operand.vmem [shape: f32[1,84], index: 4, kind: input, shape index: {}]
  %s5 = inlined_call_operand.vmem [shape: bf16[84,10], index: 5, kind: input, shape index: {}]
  %s6 = inlined_call_operand.vmem [shape: f32[1,10], index: 6, kind: input, shape index: {}]
  %s7 = inlined_call_operand.hbm [shape: f32[4,10], index: 7, kind: output, shape index: {}]
  %s8 = sld [smem:[#allocation0]]
  $region38: #{lenet5_forward.5} parent=0
    _
  %s10 = ssub.s32 1, %s8
  %s11 = scalar_select 0, %s10, %s8
  $region1: #{lenet5_forward.5} parent=0
    #allocation2 [shape = 'u8[2048]{0}', space=vmem, size = 0x800, scoped, tag = 'output window, operand 0, single buffered']
    #allocation3 [shape = 's32[1]{0}', space=sflag, size = 0x4, scoped, tag = 'scoped memory for lenet5_forward.5']
    %12 = vsyncpa [#allocation3], 0
    // Predicated region
    $region2: #{lenet5_forward.5} parent=1 // pred_check
      _
    $region3: #{lenet5_forward.5} parent=1 // pred_check_branch
      %14 = sbr.rel (0) target = $region5
    $region4: #{lenet5_forward.5} parent=1 // pred_region
      _
    $region5: #{lenet5_forward.5} parent=1 // pred_fallthru
      _
    // Predicated region
    $region6: #{lenet5_forward.5} parent=1 // pred_check
      _
    $region7: #{lenet5_forward.5} parent=1 // pred_check_branch
      %16 = sbr.rel (0) target = $region9
    $region8: #{lenet5_forward.5} parent=1 // pred_region
      _
    $region9: #{lenet5_forward.5} parent=1 // pred_fallthru
      _
    // Predicated region
    $region10: #{lenet5_forward.5} parent=1 // pred_check
      _
    $region11: #{lenet5_forward.5} parent=1 // pred_check_branch
      %18 = sbr.rel (0) target = $region13
    $region12: #{lenet5_forward.5} parent=1 // pred_region
      _
    $region13: #{lenet5_forward.5} parent=1 // pred_fallthru
      _
    // Predicated region
    $region14: #{lenet5_forward.5} parent=1 // pred_check
      _
    $region15: #{lenet5_forward.5} parent=1 // pred_check_branch
      %20 = sbr.rel (0) target = $region17
    $region16: #{lenet5_forward.5} parent=1 // pred_region
      _
    $region17: #{lenet5_forward.5} parent=1 // pred_fallthru
      _
    // Predicated region
    $region18: #{lenet5_forward.5} parent=1 // pred_check
      _
    $region19: #{lenet5_forward.5} parent=1 // pred_check_branch
      %22 = sbr.rel (0) target = $region21
    $region20: #{lenet5_forward.5} parent=1 // pred_region
      _
    $region21: #{lenet5_forward.5} parent=1 // pred_fallthru
      _
    // Predicated region
    $region22: #{lenet5_forward.5} parent=1 // pred_check
      _
    $region23: #{lenet5_forward.5} parent=1 // pred_check_branch
      %24 = sbr.rel (0) target = $region25
    $region24: #{lenet5_forward.5} parent=1 // pred_region
      _
    $region25: #{lenet5_forward.5} parent=1 // pred_fallthru
      _
    // Predicated region
    $region26: #{lenet5_forward.5} parent=1 // pred_check
      _
    $region27: #{lenet5_forward.5} parent=1 // pred_check_branch
      %26 = sbr.rel (0) target = $region29
    $region28: #{lenet5_forward.5} parent=1 // pred_region
      _
    $region29: #{lenet5_forward.5} parent=1 // pred_fallthru
      _
    %v28 = vld [vmem:[%s0] sm:$0xff]
    %v29 = vld [vmem:[%s1] sm:$0xf]
    %v30 = vld [vmem:[%s1 + $0x4] sm:$0xf]
    %v31 = vld [vmem:[%s1 + $0x8] sm:$0xf]
    %v32 = vld [vmem:[%s1 + $0xc] sm:$0xf]
    %v33 = vld [vmem:[%s1 + $0x10] sm:$0xf]
    %v34 = vld [vmem:[%s1 + $0x14] sm:$0xf]
    %v35 = vld [vmem:[%s1 + $0x18] sm:$0xf]
    %v36 = vld [vmem:[%s1 + $0x1c] sm:$0xf]
    %v37 = vld [vmem:[%s1 + $0x20] sm:$0xf]
    %v38 = vld [vmem:[%s1 + $0x24] sm:$0xf]
    %v39 = vld [vmem:[%s1 + $0x28] sm:$0xf]
    %v40 = vld [vmem:[%s1 + $0x2c] sm:$0xf]
    %v41 = vld [vmem:[%s1 + $0x30] sm:$0xf]
    %v42 = vld [vmem:[%s1 + $0x34] sm:$0xf]
    %v43 = vld [vmem:[%s1 + $0x38] sm:$0xf]
    %v44 = vld [vmem:[%s1 + $0x3c] sm:$0xf]
    %v45 = vld [vmem:[%s1 + $0x40] sm:$0xf]
    %v46 = vld [vmem:[%s1 + $0x44] sm:$0xf]
    %v47 = vld [vmem:[%s1 + $0x48] sm:$0xf]
    %v48 = vld [vmem:[%s1 + $0x4c] sm:$0xf]
    %v49 = vld [vmem:[%s1 + $0x50] sm:$0xf]
    %v50 = vld [vmem:[%s1 + $0x54] sm:$0xf]
    %v51 = vld [vmem:[%s1 + $0x58] sm:$0xf]
    %v52 = vld [vmem:[%s1 + $0x5c] sm:$0xf]
    %v53 = vld [vmem:[%s1 + $0x60] sm:$0xf]
    %v54 = vld [vmem:[%s1 + $0x64] sm:$0xf]
    %v55 = vld [vmem:[%s1 + $0x68] sm:$0xf]
    %v56 = vld [vmem:[%s1 + $0x6c] sm:$0xf]
    %v57 = vld [vmem:[%s1 + $0x70] sm:$0xf]
    %v58 = vld [vmem:[%s1 + $0x74] sm:$0xf]
    %v59 = vld [vmem:[%s1 + $0x78] sm:$0xf]
    %v60 = vld [vmem:[%s1 + $0x7c] sm:$0xf]
    %v61 = vld [vmem:[%s1 + $0x80] sm:$0xf]
    %v62 = vld [vmem:[%s1 + $0x84] sm:$0xf]
    %v63 = vld [vmem:[%s1 + $0x88] sm:$0xf]
    %v64 = vld [vmem:[%s1 + $0x8c] sm:$0xf]
    %v65 = vld [vmem:[%s1 + $0x90] sm:$0xf]
    %v66 = vld [vmem:[%s1 + $0x94] sm:$0xf]
    %v67 = vld [vmem:[%s1 + $0x98] sm:$0xf]
    %v68 = vld [vmem:[%s1 + $0x9c] sm:$0xf]
    %v69 = vld [vmem:[%s1 + $0xa0] sm:$0xf]
    %v70 = vld [vmem:[%s1 + $0xa4] sm:$0xf]
    %v71 = vld [vmem:[%s1 + $0xa8] sm:$0xf]
    %v72 = vld [vmem:[%s1 + $0xac] sm:$0xf]
    %v73 = vld [vmem:[%s1 + $0xb0] sm:$0xf]
    %v74 = vld [vmem:[%s1 + $0xb4] sm:$0xf]
    %v75 = vld [vmem:[%s1 + $0xb8] sm:$0xf]
    %v76 = vld [vmem:[%s1 + $0xbc] sm:$0xf]
    %v77 = vld [vmem:[%s1 + $0xc0] sm:$0xf]
    %v78 = vld [vmem:[%s1 + $0xc4] sm:$0xf]
    %v79 = vld [vmem:[%s2] sm:$0x1]
    %v81 = vlaneseq
    %v82 = vshrl.u32 %v81, 7
    %v83 = vsub.s32 0, %v82
    %v84 = vrot.slane %v79, %v83
    %v87 = vcombine.high %v28, %v28
    %v89 = vunpack.c.l.s4 1983009808
    %v90 = vunpack.c.0.s8 %v89
    %v91 = vlaneseq
    %v92 = vshrl.u32 %v91, 7
    %v93 = vsub.s32 %v90, %v92
    %v94 = vrot.slane %v28, %v93
    %v96 = vunpack.c.l.s4 1983009808
    %v97 = vunpack.c.0.s8 %v96
    %v98 = vlaneseq
    %v99 = vshrl.u32 %v98, 7
    %v100 = vsub.s32 %v97, %v99
    %v101 = vrot.slane %v87, %v100
    %v102 = vcombine.high %v94, %v94
    %v103 = vcombine.high %v101, %v101
    %v157 = vunpack.c.l.b16 %v29
    %v158 = vunpack.c.l.b16 %v30
    %v159 = vunpack.c.l.b16 %v31
    %v160 = vunpack.c.l.b16 %v32
    %v161 = vunpack.c.l.b16 %v33
    %v162 = vunpack.c.l.b16 %v34
    %v163 = vunpack.c.l.b16 %v35
    %v164 = vunpack.c.l.b16 %v36
    %v165 = vunpack.c.l.b16 %v37
    %v166 = vunpack.c.l.b16 %v38
    %v167 = vunpack.c.l.b16 %v39
    %v168 = vunpack.c.l.b16 %v40
    %v169 = vunpack.c.l.b16 %v41
    %v170 = vunpack.c.l.b16 %v42
    %v171 = vunpack.c.l.b16 %v43
    %v172 = vunpack.c.l.b16 %v44
    %v173 = vunpack.c.l.b16 %v45
    %v174 = vunpack.c.l.b16 %v46
    %v175 = vunpack.c.l.b16 %v47
    %v176 = vunpack.c.l.b16 %v48
    %v177 = vunpack.c.l.b16 %v49
    %v178 = vunpack.c.l.b16 %v50
    %v179 = vunpack.c.l.b16 %v51
    %v180 = vunpack.c.l.b16 %v52
    %v181 = vunpack.c.l.b16 %v53
    %v182 = vunpack.c.l.b16 %v54
    %v183 = vunpack.c.l.b16 %v55
    %v184 = vunpack.c.l.b16 %v56
    %v185 = vunpack.c.l.b16 %v57
    %v186 = vunpack.c.l.b16 %v58
    %v187 = vunpack.c.l.b16 %v59
    %v188 = vunpack.c.l.b16 %v60
    %v189 = vunpack.c.l.b16 %v61
    %v190 = vunpack.c.l.b16 %v62
    %v191 = vunpack.c.l.b16 %v63
    %v192 = vunpack.c.l.b16 %v64
    %v193 = vunpack.c.l.b16 %v65
    %v194 = vunpack.c.l.b16 %v66
    %v195 = vunpack.c.l.b16 %v67
    %v196 = vunpack.c.l.b16 %v68
    %v197 = vunpack.c.l.b16 %v69
    %v198 = vunpack.c.l.b16 %v70
    %v199 = vunpack.c.l.b16 %v71
    %v200 = vunpack.c.l.b16 %v72
    %v201 = vunpack.c.l.b16 %v73
    %v202 = vunpack.c.l.b16 %v74
    %v203 = vunpack.c.l.b16 %v75
    %v204 = vunpack.c.l.b16 %v76
    %v205 = vunpack.c.l.b16 %v77
    %v206 = vunpack.c.l.b16 %v78
    %v207 = vpack.c.b16 %v158, %v157
    %v208 = vpack.c.b16 %v160, %v159
    %v209 = vpack.c.b16 %v162, %v161
    %v210 = vpack.c.b16 %v164, %v163
    %v211 = vpack.c.b16 %v166, %v165
    %v212 = vpack.c.b16 %v168, %v167
    %v213 = vpack.c.b16 %v170, %v169
    %v214 = vpack.c.b16 %v172, %v171
    %v215 = vpack.c.b16 %v174, %v173
    %v216 = vpack.c.b16 %v176, %v175
    %v217 = vpack.c.b16 %v178, %v177
    %v218 = vpack.c.b16 %v180, %v179
    %v219 = vpack.c.b16 %v182, %v181
    %v220 = vpack.c.b16 %v184, %v183
    %v221 = vpack.c.b16 %v186, %v185
    %v222 = vpack.c.b16 %v188, %v187
    %v223 = vpack.c.b16 %v190, %v189
    %v224 = vpack.c.b16 %v192, %v191
    %v225 = vpack.c.b16 %v194, %v193
    %v226 = vpack.c.b16 %v196, %v195
    %v227 = vpack.c.b16 %v198, %v197
    %v228 = vpack.c.b16 %v200, %v199
    %v229 = vpack.c.b16 %v202, %v201
    %v230 = vpack.c.b16 %v204, %v203
    %v231 = vpack.c.b16 %v206, %v205
    %vm257 = vcmask 130048
    %v259 = vsel %vm257, %v103, 0
    %261 = vmatprep.subr.bf16.mxu0 0
    %262 = vmatpush1.bf16.msra.mxu0 %v207
    %263 = vmatprep.subr.bf16.mxu0 0
    %264 = vmatpush1.bf16.msra.mxu0 %v208
    %265 = vmatprep.subr.bf16.mxu0 0
    %266 = vmatpush1.bf16.msra.mxu0 %v209
    %267 = vmatprep.subr.bf16.mxu0 0
    %268 = vmatpush1.bf16.msra.mxu0 %v210
    %269 = vmatprep.subr.bf16.mxu0 0
    %270 = vmatpush1.bf16.msra.mxu0 %v211
    %271 = vmatprep.subr.bf16.mxu0 0
    %272 = vmatpush1.bf16.msra.mxu0 %v212
    %273 = vmatprep.subr.bf16.mxu0 0
    %274 = vmatpush1.bf16.msra.mxu0 %v213
    %275 = vmatprep.subr.bf16.mxu0 0
    %276 = vmatpush1.bf16.msra.mxu0 %v214
    %277 = vmatprep.subr.bf16.mxu0 0
    %278 = vmatpush1.bf16.msra.mxu0 %v215
    %279 = vmatprep.subr.bf16.mxu0 0
    %280 = vmatpush1.bf16.msra.mxu0 %v216
    %281 = vmatprep.subr.bf16.mxu0 0
    %282 = vmatpush1.bf16.msra.mxu0 %v217
    %283 = vmatprep.subr.bf16.mxu0 0
    %284 = vmatpush1.bf16.msra.mxu0 %v218
    %285 = vmatprep.subr.bf16.mxu0 0
    %286 = vmatpush1.bf16.msra.mxu0 %v219
    %287 = vmatprep.subr.bf16.mxu0 0
    %288 = vmatpush1.bf16.msra.mxu0 %v220
    %289 = vmatprep.subr.bf16.mxu0 0
    %290 = vmatpush1.bf16.msra.mxu0 %v221
    %291 = vmatprep.subr.bf16.mxu0 0
    %292 = vmatpush1.bf16.msra.mxu0 %v222
    %293 = vmatprep.mubr.bf16.mxu0 %v102
    %294 = vmatmul.mubr.bf16.gmra.mrb[0].mxu0 %v94
    %v295 = vpop.f32.mrb[0].mxu0
    %v296 = vadd.f32 %v84, %v295
    %v297 = vpop.f32.mrb[0].mxu0
    %v298 = vpop.f32.mrb[0].mxu0
    %v299 = vpop.f32.mrb[0].mxu0
    %300 = vdwg.mxu0
    %301 = vmatprep.subr.bf16.mxu0 0
    %302 = vmatpush1.bf16.msra.mxu0 %v223
    %303 = vmatprep.subr.bf16.mxu0 0
    %304 = vmatpush1.bf16.msra.mxu0 %v224
    %305 = vmatprep.subr.bf16.mxu0 0
    %306 = vmatpush1.bf16.msra.mxu0 %v225
    %307 = vmatprep.subr.bf16.mxu0 0
    %308 = vmatpush1.bf16.msra.mxu0 %v226
    %309 = vmatprep.subr.bf16.mxu0 0
    %310 = vmatpush1.bf16.msra.mxu0 %v227
    %311 = vmatprep.subr.bf16.mxu0 0
    %312 = vmatpush1.bf16.msra.mxu0 %v228
    %313 = vmatprep.subr.bf16.mxu0 0
    %314 = vmatpush1.bf16.msra.mxu0 %v229
    %315 = vmatprep.subr.bf16.mxu0 0
    %316 = vmatpush1.bf16.msra.mxu0 %v230
    %317 = vmatprep.subr.bf16.mxu0 0
    %318 = vmatpush1.bf16.msra.mxu0 %v231
    %319 = vmatprep.subr.bf16.mxu0 0
    %320 = vmatpush1.bf16.msra.mxu0 0
    %321 = vmatprep.subr.bf16.mxu0 0
    %322 = vmatpush1.bf16.msra.mxu0 0
    %323 = vmatprep.subr.bf16.mxu0 0
    %324 = vmatpush1.bf16.msra.mxu0 0
    %325 = vmatprep.subr.bf16.mxu0 0
    %326 = vmatpush1.bf16.msra.mxu0 0
    %327 = vmatprep.subr.bf16.mxu0 0
    %328 = vmatpush1.bf16.msra.mxu0 0
    %329 = vmatprep.subr.bf16.mxu0 0
    %330 = vmatpush1.bf16.msra.mxu0 0
    %331 = vmatprep.subr.bf16.mxu0 0
    %332 = vmatpush1.bf16.msra.mxu0 0
    %333 = vmatprep.mubr.bf16.mxu0 %v259
    %334 = vmatmul.mubr.bf16.gmra.mrb[0].mxu0 %v101
    %v335 = vpop.f32.mrb[0].mxu0
    %v336 = vadd.f32 %v296, %v335
    %v337 = vpop.f32.mrb[0].mxu0
    %v338 = vpop.f32.mrb[0].mxu0
    %v339 = vpop.f32.mrb[0].mxu0
    %340 = vdwg.mxu0
    %v341 = vmax.f32 %v336, 0.0
    %v342 = vpack.c.bf16 %v341, %v341
    %v343 = vld [vmem:[%s3] sm:$0xf]
    %v344 = vld [vmem:[%s3 + $0x4] sm:$0xf]
    %v345 = vld [vmem:[%s3 + $0x8] sm:$0xf]
    %v346 = vld [vmem:[%s3 + $0xc] sm:$0xf]
    %v347 = vld [vmem:[%s3 + $0x10] sm:$0xf]
    %v348 = vld [vmem:[%s3 + $0x14] sm:$0xf]
    %v349 = vld [vmem:[%s3 + $0x18] sm:$0xf]
    %v350 = vld [vmem:[%s3 + $0x1c] sm:$0xf]
    %v351 = vld [vmem:[%s3 + $0x20] sm:$0xf]
    %v352 = vld [vmem:[%s3 + $0x24] sm:$0xf]
    %v353 = vld [vmem:[%s3 + $0x28] sm:$0xf]
    %v354 = vld [vmem:[%s3 + $0x2c] sm:$0xf]
    %v355 = vld [vmem:[%s3 + $0x30] sm:$0xf]
    %v356 = vld [vmem:[%s3 + $0x34] sm:$0xf]
    %v357 = vld [vmem:[%s3 + $0x38] sm:$0xf]
    %v358 = vld [vmem:[%s4] sm:$0x1]
    %v360 = vlaneseq
    %v361 = vshrl.u32 %v360, 7
    %v362 = vsub.s32 0, %v361
    %v363 = vrot.slane %v358, %v362
    %v380 = vunpack.c.l.b16 %v343
    %v381 = vunpack.c.l.b16 %v344
    %v382 = vunpack.c.l.b16 %v345
    %v383 = vunpack.c.l.b16 %v346
    %v384 = vunpack.c.l.b16 %v347
    %v385 = vunpack.c.l.b16 %v348
    %v386 = vunpack.c.l.b16 %v349
    %v387 = vunpack.c.l.b16 %v350
    %v388 = vunpack.c.l.b16 %v351
    %v389 = vunpack.c.l.b16 %v352
    %v390 = vunpack.c.l.b16 %v353
    %v391 = vunpack.c.l.b16 %v354
    %v392 = vunpack.c.l.b16 %v355
    %v393 = vunpack.c.l.b16 %v356
    %v394 = vunpack.c.l.b16 %v357
    %v395 = vpack.c.b16 %v381, %v380
    %v396 = vpack.c.b16 %v383, %v382
    %v397 = vpack.c.b16 %v385, %v384
    %v398 = vpack.c.b16 %v387, %v386
    %v399 = vpack.c.b16 %v389, %v388
    %v400 = vpack.c.b16 %v391, %v390
    %v401 = vpack.c.b16 %v393, %v392
    %v402 = vpack.c.b16 %v394, %v394
    %vm410 = vcmask 982016
    %v412 = vsel %vm410, %v342, 0
    %vm414 = vcmask 1043456
    %v416 = vsel %vm414, %v402, 0
    %418 = vmatprep.subr.bf16.mxu0 0
    %419 = vmatpush1.bf16.msra.mxu0 %v395
    %420 = vmatprep.subr.bf16.mxu0 0
    %421 = vmatpush1.bf16.msra.mxu0 %v396
    %422 = vmatprep.subr.bf16.mxu0 0
    %423 = vmatpush1.bf16.msra.mxu0 %v397
    %424 = vmatprep.subr.bf16.mxu0 0
    %425 = vmatpush1.bf16.msra.mxu0 %v398
    %426 = vmatprep.subr.bf16.mxu0 0
    %427 = vmatpush1.bf16.msra.mxu0 %v399
    %428 = vmatprep.subr.bf16.mxu0 0
    %429 = vmatpush1.bf16.msra.mxu0 %v400
    %430 = vmatprep.subr.bf16.mxu0 0
    %431 = vmatpush1.bf16.msra.mxu0 %v401
    %432 = vmatprep.subr.bf16.mxu0 0
    %433 = vmatpush1.bf16.msra.mxu0 %v416
    %434 = vmatprep.subr.bf16.mxu0 0
    %435 = vmatpush1.bf16.msra.mxu0 0
    %436 = vmatprep.subr.bf16.mxu0 0
    %437 = vmatpush1.bf16.msra.mxu0 0
    %438 = vmatprep.subr.bf16.mxu0 0
    %439 = vmatpush1.bf16.msra.mxu0 0
    %440 = vmatprep.subr.bf16.mxu0 0
    %441 = vmatpush1.bf16.msra.mxu0 0
    %442 = vmatprep.subr.bf16.mxu0 0
    %443 = vmatpush1.bf16.msra.mxu0 0
    %444 = vmatprep.subr.bf16.mxu0 0
    %445 = vmatpush1.bf16.msra.mxu0 0
    %446 = vmatprep.subr.bf16.mxu0 0
    %447 = vmatpush1.bf16.msra.mxu0 0
    %448 = vmatprep.subr.bf16.mxu0 0
    %449 = vmatpush1.bf16.msra.mxu0 0
    %450 = vmatprep.mubr.bf16.mxu0 0
    %451 = vmatmul.mubr.bf16.gmra.mrb[0].mxu0 %v412
    %v452 = vpop.f32.mrb[0].mxu0
    %v453 = vadd.f32 %v363, %v452
    %v454 = vpop.f32.mrb[0].mxu0
    %v455 = vpop.f32.mrb[0].mxu0
    %v456 = vpop.f32.mrb[0].mxu0
    %457 = vdwg.mxu0
    %v458 = vmax.f32 %v453, 0.0
    %v459 = vpack.c.bf16 %v458, %v458
    %v460 = vld [vmem:[%s5] sm:$0xf]
    %v461 = vld [vmem:[%s5 + $0x4] sm:$0xf]
    %v462 = vld [vmem:[%s5 + $0x8] sm:$0xf]
    %v463 = vld [vmem:[%s5 + $0xc] sm:$0xf]
    %v464 = vld [vmem:[%s5 + $0x10] sm:$0xf]
    %v465 = vld [vmem:[%s5 + $0x14] sm:$0xf]
    %v466 = vld [vmem:[%s5 + $0x18] sm:$0xf]
    %v467 = vld [vmem:[%s5 + $0x1c] sm:$0xf]
    %v468 = vld [vmem:[%s5 + $0x20] sm:$0xf]
    %v469 = vld [vmem:[%s5 + $0x24] sm:$0xf]
    %v470 = vld [vmem:[%s5 + $0x28] sm:$0x3]
    %v471 = vld [vmem:[%s6] sm:$0x1]
    %v473 = vlaneseq
    %v474 = vshrl.u32 %v473, 7
    %v475 = vsub.s32 0, %v474
    %v476 = vrot.slane %v471, %v475
    %v489 = vunpack.c.l.b16 %v460
    %v490 = vunpack.c.l.b16 %v461
    %v491 = vunpack.c.l.b16 %v462
    %v492 = vunpack.c.l.b16 %v463
    %v493 = vunpack.c.l.b16 %v464
    %v494 = vunpack.c.l.b16 %v465
    %v495 = vunpack.c.l.b16 %v466
    %v496 = vunpack.c.l.b16 %v467
    %v497 = vunpack.c.l.b16 %v468
    %v498 = vunpack.c.l.b16 %v469
    %v499 = vunpack.c.l.b16 %v470
    %v500 = vpack.c.b16 %v490, %v489
    %v501 = vpack.c.b16 %v492, %v491
    %v502 = vpack.c.b16 %v494, %v493
    %v503 = vpack.c.b16 %v496, %v495
    %v504 = vpack.c.b16 %v498, %v497
    %v505 = vpack.c.b16 %v499, %v499
    %vm511 = vcmask 687104
    %v513 = vsel %vm511, %v459, 0
    %vm515 = vcmask 1041408
    %v517 = vsel %vm515, %v505, 0
    %519 = vmatprep.subr.bf16.mxu0 0
    %520 = vmatpush1.bf16.msra.mxu0 %v500
    %521 = vmatprep.subr.bf16.mxu0 0
    %522 = vmatpush1.bf16.msra.mxu0 %v501
    %523 = vmatprep.subr.bf16.mxu0 0
    %524 = vmatpush1.bf16.msra.mxu0 %v502
    %525 = vmatprep.subr.bf16.mxu0 0
    %526 = vmatpush1.bf16.msra.mxu0 %v503
    %527 = vmatprep.subr.bf16.mxu0 0
    %528 = vmatpush1.bf16.msra.mxu0 %v504
    %529 = vmatprep.subr.bf16.mxu0 0
    %530 = vmatpush1.bf16.msra.mxu0 %v517
    %531 = vmatprep.subr.bf16.mxu0 0
    %532 = vmatpush1.bf16.msra.mxu0 0
    %533 = vmatprep.subr.bf16.mxu0 0
    %534 = vmatpush1.bf16.msra.mxu0 0
    %535 = vmatprep.subr.bf16.mxu0 0
    %536 = vmatpush1.bf16.msra.mxu0 0
    %537 = vmatprep.subr.bf16.mxu0 0
    %538 = vmatpush1.bf16.msra.mxu0 0
    %539 = vmatprep.subr.bf16.mxu0 0
    %540 = vmatpush1.bf16.msra.mxu0 0
    %541 = vmatprep.subr.bf16.mxu0 0
    %542 = vmatpush1.bf16.msra.mxu0 0
    %543 = vmatprep.subr.bf16.mxu0 0
    %544 = vmatpush1.bf16.msra.mxu0 0
    %545 = vmatprep.subr.bf16.mxu0 0
    %546 = vmatpush1.bf16.msra.mxu0 0
    %547 = vmatprep.subr.bf16.mxu0 0
    %548 = vmatpush1.bf16.msra.mxu0 0
    %549 = vmatprep.subr.bf16.mxu0 0
    %550 = vmatpush1.bf16.msra.mxu0 0
    %551 = vmatprep.mubr.bf16.mxu0 0
    %552 = vmatmul.mubr.bf16.gmra.mrb[0].mxu0 %v513
    %v553 = vpop.f32.mrb[0].mxu0
    %v554 = vadd.f32 %v476, %v553
    %v555 = vpop.f32.mrb[0].mxu0
    %v556 = vpop.f32.mrb[0].mxu0
    %v557 = vpop.f32.mrb[0].mxu0
    %558 = vdwg.mxu0
    %vm559 = vcmask 76800
    %v560 = vsel %vm559, %v554, -inf
    %561 = vmax.xlane.f32.xlu0 %v560
    %v562 = vpop.xlane.xlu0 %561
    %v563 = vsub.f32 %v554, %v562
    %v564 = vmul.f32 %v563, 1.442695
    %v565 = vpow.pop %v564
    %v566 = vsel %vm559, %v565, 0.0
    %567 = vadd.xlane.f32.xlu0 %v566
    %v568 = vpop.xlane.xlu0 %567
    %v569 = vlog2.pop %v568
    %v570 = vmul.f32 %v569, 0.6931472
    %v571 = vsub.f32 %v563, %v570
    %572 = vst.msk [vmem:[#allocation2] sm:$0xf] %vm559, %v571
    // Predicated region
    $region30: #{lenet5_forward.5} parent=1 // pred_check
      _
    $region31: #{lenet5_forward.5} parent=1 // pred_check_branch
      %574 = sbr.rel (0) target = $region33
    $region32: #{lenet5_forward.5} parent=1 // pred_region
      %s576 = ssub.s32 64, 64
      %577 = vsyncadd [#allocation3], %s576
      %s579 = sshll.u32 [#allocation2], 4
      %s580 = int_to_ptr.vmem [resolvable:$true] %s579
      %582 = dma.vmem_to_hbm [thread:$0]  %s580, 64, %s7, [#allocation3]
    $region33: #{lenet5_forward.5} parent=1 // pred_fallthru
      _
    // Predicated region
    $region34: #{lenet5_forward.5} parent=1 // pred_check
      _
    $region35: #{lenet5_forward.5} parent=1 // pred_check_branch
      %584 = sbr.rel (0) target = $region37
    $region36: #{lenet5_forward.5} parent=1 // pred_region
      %585 = dma.done [#allocation3], 64
    $region37: #{lenet5_forward.5} parent=1 // pred_fallthru
      _
    %586 = vsyncpa [#allocation3], 1

</llo_original>
